<compile_context>
chip_gen: v6e
topology: v6e:2x2x1
jax: 0.10.0
libtpu: 0.0.40
codegen_flags: <defaults>
</compile_context>

<pallas_src>
import functools
import math

import jax
import jax.numpy as jnp
import numpy as np
from jax import lax
from jax.experimental import pallas as pl
from jax.experimental.pallas import tpu as pltpu


def mha_kernel(q_ref, k_ref, v_ref, mask_ref,
               wq_ref, bq_ref, wk_ref, bk_ref, wv_ref, bv_ref,
               wo_ref, bo_ref, out_ref, kproj_ref, vproj_ref,
               *, n_heads, d_k, d_v):
    f32 = jnp.float32
    bf16 = jnp.bfloat16

    # K/V projections: compute once per batch element (first query tile) and
    # keep them resident in VMEM scratch for every remaining query tile.
    @pl.when(pl.program_id(1) == 0)
    def _():
        k = k_ref[0]                       # (Sk, d_model)  bf16
        v = v_ref[0]                       # (Sk, d_model)  bf16
        K = jnp.dot(k, wk_ref[...], preferred_element_type=f32) + bk_ref[...]
        V = jnp.dot(v, wv_ref[...], preferred_element_type=f32) + bv_ref[...]
        kproj_ref[...] = K.astype(bf16)    # (Sk, n_heads*d_k)
        vproj_ref[...] = V.astype(bf16)    # (Sk, n_heads*d_v)

    q = q_ref[0]                           # (tq, d_model)  bf16
    keep = mask_ref[0] != 0                # (tq, Sk) bool from int8 mask

    # Q projection; fold the softmax scale in once (cheaper than scaling the
    # (tq, Sk) score tile of every head).
    scale = f32(1.0 / math.sqrt(d_k))
    Q = (jnp.dot(q, wq_ref[...], preferred_element_type=f32)
         + bq_ref[...]) * scale            # (tq, n_heads*d_k)  f32

    Kp = kproj_ref[...]                    # (Sk, n_heads*d_k)  bf16
    Vp = vproj_ref[...]                    # (Sk, n_heads*d_v)  bf16

    contract_last = (((1,), (1,)), ((), ()))   # contract last dim of both sides
    tq = out_ref.shape[1]
    d_model = out_ref.shape[2]
    acc = jnp.zeros((tq, d_model), f32)

    for h in range(n_heads):               # static unroll over heads
        Qh = Q[:, h * d_k:(h + 1) * d_k].astype(bf16)   # (tq, d_k)
        Kh = Kp[:, h * d_k:(h + 1) * d_k]               # (Sk, d_k)
        Vh = Vp[:, h * d_v:(h + 1) * d_v]               # (Sk, d_v)

        # Scores: contract on the head dim directly (no materialized Kh.T).
        s = lax.dot_general(Qh, Kh, contract_last, preferred_element_type=f32)
        s = jnp.where(keep, s, f32(-1e9))

        # Numerically-stable softmax in f32; reciprocal goes to the EUP.
        s = s - jnp.max(s, axis=-1, keepdims=True)
        p = jnp.exp(s)
        p = p * pl.reciprocal(jnp.sum(p, axis=-1, keepdims=True), approx=True)

        head = jnp.dot(p.astype(bf16), Vh, preferred_element_type=f32)  # (tq, d_v)

        # Fold the output projection per head:
        #   concat(heads) @ Wo == sum_h head_h @ Wo[h*d_v:(h+1)*d_v, :]
        wo_h = wo_ref[h * d_v:(h + 1) * d_v, :]                         # (d_v, d_model)
        acc = acc + jnp.dot(head.astype(bf16), wo_h, preferred_element_type=f32)

    out_ref[0] = (acc + bo_ref[...]).astype(out_ref.dtype)
    # TODO(synk): dropout (p=0.0 in this config) is identity and omitted.


def multi_head_attention(q, k, v, mask, params, *, n_heads, d_k, d_v,
                         max_q_tile=256):
    B, Sq, d_model = q.shape
    _, Sk, _ = k.shape
    wq, bq, wk, bk, wv, bv, wo, bo = params

    # Compute dtypes: bf16 operands for the MXU, f32 biases / softmax / output.
    bf16 = jnp.bfloat16
    q_c, k_c, v_c = (x.astype(bf16) for x in (q, k, v))
    wq_c, wk_c, wv_c, wo_c = (w.astype(bf16) for w in (wq, wk, wv, wo))
    bq_c, bk_c, bv_c, bo_c = (b.astype(jnp.float32) for b in (bq, bk, bv, bo))

    if mask is None:   # optional mask (module spec): attend everywhere
        mask_i8 = jnp.ones((B, Sq, Sk), jnp.int8)
    else:
        mask_i8 = mask.astype(jnp.int8)    # 1 = attend, 0 = masked

    # Query tiling: grid over (batch, Sq tiles). K/V + weights stay resident
    # across the query-tile axis (their index_map ignores it); K/V projections
    # are computed once per batch and cached in VMEM scratch.
    tq = Sq if Sq <= max_q_tile else max_q_tile
    if Sq % tq != 0:
        tq = Sq
    n_q_tiles = Sq // tq

    kernel = functools.partial(mha_kernel, n_heads=n_heads, d_k=d_k, d_v=d_v)

    def resident(arr):                  # full-extent block, same every step
        return pl.BlockSpec(arr.shape, lambda b, i: (0, 0))

    # Advisory cost hint for XLA's scheduler around the custom call.
    flops = 2 * B * (Sq * d_model * n_heads * d_k          # Q proj
                     + Sk * d_model * n_heads * d_k        # K proj (once/batch)
                     + Sk * d_model * n_heads * d_v        # V proj (once/batch)
                     + n_heads * Sq * Sk * (d_k + d_v)     # attention
                     + Sq * n_heads * d_v * d_model)       # out proj (folded)
    transcendentals = B * n_heads * Sq * (Sk + 1)
    bytes_accessed = (
        (q_c.size + k_c.size + v_c.size) * 2 + mask_i8.size
        + (wq_c.size + wk_c.size + wv_c.size + wo_c.size) * 2
        + (bq_c.size + bk_c.size + bv_c.size + bo_c.size) * 4
        + B * Sq * d_model * 4)

    return pl.pallas_call(
        kernel,
        out_shape=jax.ShapeDtypeStruct((B, Sq, d_model), jnp.float32),
        grid_spec=pltpu.PrefetchScalarGridSpec(
            num_scalar_prefetch=0,
            grid=(B, n_q_tiles),
            in_specs=[
                pl.BlockSpec((1, tq, d_model), lambda b, i: (b, i, 0)),  # q tile
                pl.BlockSpec((1, Sk, d_model), lambda b, i: (b, 0, 0)),  # k (resident over i)
                pl.BlockSpec((1, Sk, d_model), lambda b, i: (b, 0, 0)),  # v (resident over i)
                pl.BlockSpec((1, tq, Sk),      lambda b, i: (b, i, 0)),  # mask (int8)
                resident(wq_c), resident(bq_c),
                resident(wk_c), resident(bk_c),
                resident(wv_c), resident(bv_c),
                resident(wo_c), resident(bo_c),
            ],
            out_specs=pl.BlockSpec((1, tq, d_model), lambda b, i: (b, i, 0)),
            scratch_shapes=[
                pltpu.VMEM((Sk, n_heads * d_k), jnp.bfloat16),   # cached K proj
                pltpu.VMEM((Sk, n_heads * d_v), jnp.bfloat16),   # cached V proj
            ],
        ),
        compiler_params=pltpu.CompilerParams(
            # batch shards across cores; query-tile axis must iterate in order
            # on one core so the "compute K/V proj at tile 0" guard is valid.
            dimension_semantics=("parallel", "arbitrary")),
        cost_estimate=pl.CostEstimate(
            flops=int(flops),
            transcendentals=int(transcendentals),
            bytes_accessed=int(bytes_accessed)),
    )(q_c, k_c, v_c, mask_i8,
      wq_c, bq_c, wk_c, bk_c, wv_c, bv_c, wo_c, bo_c)


def mha_reference(q, k, v, mask, params, *, n_heads, d_k, d_v):
    """Pure-JAX f32 reference (same semantics as torch MultiHeadAttention)."""
    wq, bq, wk, bk, wv, bv, wo, bo = params
    B, Sq, _ = q.shape
    _, Sk, _ = k.shape

    Q = (q @ wq + bq).reshape(B, Sq, n_heads, d_k).transpose(0, 2, 1, 3)
    K = (k @ wk + bk).reshape(B, Sk, n_heads, d_k).transpose(0, 2, 1, 3)
    V = (v @ wv + bv).reshape(B, Sk, n_heads, d_v).transpose(0, 2, 1, 3)

    s = jnp.einsum("bhqd,bhkd->bhqk", Q, K) / math.sqrt(d_k)
    if mask is not None:
        s = jnp.where(mask[:, None, :, :] == 0, -1e9, s)
    p = jax.nn.softmax(s, axis=-1)
    o = jnp.einsum("bhqk,bhkd->bhqd", p, V)
    o = o.transpose(0, 2, 1, 3).reshape(B, Sq, n_heads * d_v)
    return o @ wo + bo


if __name__ == "__main__":
    # Small, module-consistent shapes.
    B, Sq, Sk = 2, 8, 8
    d_model, d_k, d_v, n_heads = 32, 16, 16, 4

    key = jax.random.PRNGKey(0)
    ks = jax.random.split(key, 12)

    q = jax.random.normal(ks[0], (B, Sq, d_model), jnp.float32)
    k = jax.random.normal(ks[1], (B, Sk, d_model), jnp.float32)
    v = jax.random.normal(ks[2], (B, Sk, d_model), jnp.float32)
    # causal mask (1 = attend, 0 = masked), broadcast over batch
    mask = jnp.broadcast_to(jnp.tril(jnp.ones((Sq, Sk), jnp.float32)),
                            (B, Sq, Sk))

    def init_w(kk, fan_in, fan_out):
        return 0.02 * jax.random.normal(kk, (fan_in, fan_out), jnp.float32)

    params = (
        init_w(ks[3], d_model, n_heads * d_k),                             # Wq
        0.01 * jax.random.normal(ks[4], (1, n_heads * d_k), jnp.float32),  # bq
        init_w(ks[5], d_model, n_heads * d_k),                             # Wk
        0.01 * jax.random.normal(ks[6], (1, n_heads * d_k), jnp.float32),  # bk
        init_w(ks[7], d_model, n_heads * d_v),                             # Wv
        0.01 * jax.random.normal(ks[8], (1, n_heads * d_v), jnp.float32),  # bv
        init_w(ks[9], n_heads * d_v, d_model),                             # Wo
        0.01 * jax.random.normal(ks[10], (1, d_model), jnp.float32),       # bo
    )

    out = multi_head_attention(q, k, v, mask, params,
                               n_heads=n_heads, d_k=d_k, d_v=d_v)
    out = jax.block_until_ready(out)

    ref = mha_reference(q, k, v, mask, params,
                        n_heads=n_heads, d_k=d_k, d_v=d_v)
    # bf16 MXU operands + approx reciprocal vs. pure-f32 reference -> loose tol.
    np.testing.assert_allclose(np.asarray(out), np.asarray(ref),
                               rtol=2e-2, atol=2e-2)
    print("KERNEL_OK")
</pallas_src>

<mosaic_0001>
module attributes {stable_mosaic.version = 11 : i64} {
  func.func @mha_kernel(%arg0: i32, %arg1: i32, %arg2: memref<1x8x32xbf16, #tpu.memory_space<vmem>>, %arg3: memref<1x8x32xbf16, #tpu.memory_space<vmem>>, %arg4: memref<1x8x32xbf16, #tpu.memory_space<vmem>>, %arg5: memref<1x8x8xi8, #tpu.memory_space<vmem>>, %arg6: memref<32x64xbf16, #tpu.memory_space<vmem>>, %arg7: memref<1x64xf32, #tpu.memory_space<vmem>>, %arg8: memref<32x64xbf16, #tpu.memory_space<vmem>>, %arg9: memref<1x64xf32, #tpu.memory_space<vmem>>, %arg10: memref<32x64xbf16, #tpu.memory_space<vmem>>, %arg11: memref<1x64xf32, #tpu.memory_space<vmem>>, %arg12: memref<64x32xbf16, #tpu.memory_space<vmem>>, %arg13: memref<1x32xf32, #tpu.memory_space<vmem>>, %arg14: memref<1x8x32xf32, #tpu.memory_space<vmem>>, %arg15: memref<8x64xbf16, #tpu.memory_space<vmem>>, %arg16: memref<8x64xbf16, #tpu.memory_space<vmem>>) attributes {dimension_semantics = [#tpu.dimension_semantics<parallel>, #tpu.dimension_semantics<arbitrary>], iteration_bounds = array<i64: 2, 1>, scalar_prefetch = 0 : i64, scratch_operands = 2 : i64, tpu.core_type = #tpu.core_type<tc>, window_params = [{transform_indices = @transform_0, window_bounds = array<i64: 1, 8, 32>}, {transform_indices = @transform_1, window_bounds = array<i64: 1, 8, 32>}, {transform_indices = @transform_2, window_bounds = array<i64: 1, 8, 32>}, {transform_indices = @transform_3, window_bounds = array<i64: 1, 8, 8>}, {pipeline_mode = #tpu.pipeline_mode<synchronous>, transform_indices = @transform_4, window_bounds = array<i64: 32, 64>}, {pipeline_mode = #tpu.pipeline_mode<synchronous>, transform_indices = @transform_5, window_bounds = array<i64: 1, 64>}, {pipeline_mode = #tpu.pipeline_mode<synchronous>, transform_indices = @transform_6, window_bounds = array<i64: 32, 64>}, {pipeline_mode = #tpu.pipeline_mode<synchronous>, transform_indices = @transform_7, window_bounds = array<i64: 1, 64>}, {pipeline_mode = #tpu.pipeline_mode<synchronous>, transform_indices = @transform_8, window_bounds = array<i64: 32, 64>}, {pipeline_mode = #tpu.pipeline_mode<synchronous>, transform_indices = @transform_9, window_bounds = array<i64: 1, 64>}, {pipeline_mode = #tpu.pipeline_mode<synchronous>, transform_indices = @transform_10, window_bounds = array<i64: 64, 32>}, {pipeline_mode = #tpu.pipeline_mode<synchronous>, transform_indices = @transform_11, window_bounds = array<i64: 1, 32>}, {transform_indices = @transform_12, window_bounds = array<i64: 1, 8, 32>}]} {
    %c0_i32 = arith.constant 0 : i32
    %0 = arith.cmpi eq, %arg1, %c0_i32 : i32
    %1 = arith.extui %0 : i1 to i32
    %c0_i32_0 = arith.constant 0 : i32
    %2 = arith.cmpi ne, %1, %c0_i32_0 : i32
    scf.if %2 {
      %c0_50 = arith.constant 0 : index
      %c0_51 = arith.constant 0 : index
      %c0_52 = arith.constant 0 : index
      %117 = vector.load %arg3[%c0_50, %c0_51, %c0_52] : memref<1x8x32xbf16, #tpu.memory_space<vmem>>, vector<1x8x32xbf16>
      %118 = vector.shape_cast %117 : vector<1x8x32xbf16> to vector<8x32xbf16>
      %c0_53 = arith.constant 0 : index
      %c0_54 = arith.constant 0 : index
      %c0_55 = arith.constant 0 : index
      %119 = vector.load %arg4[%c0_53, %c0_54, %c0_55] : memref<1x8x32xbf16, #tpu.memory_space<vmem>>, vector<1x8x32xbf16>
      %120 = vector.shape_cast %119 : vector<1x8x32xbf16> to vector<8x32xbf16>
      %c0_56 = arith.constant 0 : index
      %c0_57 = arith.constant 0 : index
      %121 = vector.load %arg8[%c0_56, %c0_57] : memref<32x64xbf16, #tpu.memory_space<vmem>>, vector<32x64xbf16>
      %cst_58 = arith.constant dense<0.000000e+00> : vector<8x64xf32>
      %122 = tpu.matmul %118, %121, %cst_58 {dimension_numbers = #tpu.dot_dimension_numbers<[1], [0], [0], [1], [0, 0, 1, 1], [], []>} : vector<8x32xbf16>, vector<32x64xbf16>, vector<8x64xf32> -> vector<8x64xf32>
      %c0_59 = arith.constant 0 : index
      %c0_60 = arith.constant 0 : index
      %123 = vector.load %arg9[%c0_59, %c0_60] : memref<1x64xf32, #tpu.memory_space<vmem>>, vector<1x64xf32>
      %124 = vector.broadcast %123 : vector<1x64xf32> to vector<8x64xf32>
      %125 = arith.addf %122, %124 : vector<8x64xf32>
      %c0_61 = arith.constant 0 : index
      %c0_62 = arith.constant 0 : index
      %126 = vector.load %arg10[%c0_61, %c0_62] : memref<32x64xbf16, #tpu.memory_space<vmem>>, vector<32x64xbf16>
      %cst_63 = arith.constant dense<0.000000e+00> : vector<8x64xf32>
      %127 = tpu.matmul %120, %126, %cst_63 {dimension_numbers = #tpu.dot_dimension_numbers<[1], [0], [0], [1], [0, 0, 1, 1], [], []>} : vector<8x32xbf16>, vector<32x64xbf16>, vector<8x64xf32> -> vector<8x64xf32>
      %c0_64 = arith.constant 0 : index
      %c0_65 = arith.constant 0 : index
      %128 = vector.load %arg11[%c0_64, %c0_65] : memref<1x64xf32, #tpu.memory_space<vmem>>, vector<1x64xf32>
      %129 = vector.broadcast %128 : vector<1x64xf32> to vector<8x64xf32>
      %130 = arith.addf %127, %129 : vector<8x64xf32>
      %131 = arith.truncf %125 : vector<8x64xf32> to vector<8x64xbf16>
      %c0_66 = arith.constant 0 : index
      %c0_67 = arith.constant 0 : index
      %132 = vector.load %arg15[%c0_66, %c0_67] : memref<8x64xbf16, #tpu.memory_space<vmem>>, vector<8x64xbf16>
      tpu.vector_store %arg15[%c0_66, %c0_67], %131 {strides = array<i32>} : memref<8x64xbf16, #tpu.memory_space<vmem>>, vector<8x64xbf16>,
      %133 = arith.truncf %130 : vector<8x64xf32> to vector<8x64xbf16>
      %c0_68 = arith.constant 0 : index
      %c0_69 = arith.constant 0 : index
      %134 = vector.load %arg16[%c0_68, %c0_69] : memref<8x64xbf16, #tpu.memory_space<vmem>>, vector<8x64xbf16>
      tpu.vector_store %arg16[%c0_68, %c0_69], %133 {strides = array<i32>} : memref<8x64xbf16, #tpu.memory_space<vmem>>, vector<8x64xbf16>,
    } else {
    }
    %c0 = arith.constant 0 : index
    %c0_1 = arith.constant 0 : index
    %c0_2 = arith.constant 0 : index
    %3 = vector.load %arg2[%c0, %c0_1, %c0_2] : memref<1x8x32xbf16, #tpu.memory_space<vmem>>, vector<1x8x32xbf16>
    %4 = vector.shape_cast %3 : vector<1x8x32xbf16> to vector<8x32xbf16>
    %c0_3 = arith.constant 0 : index
    %c0_4 = arith.constant 0 : index
    %c0_5 = arith.constant 0 : index
    %5 = vector.load %arg5[%c0_3, %c0_4, %c0_5] : memref<1x8x8xi8, #tpu.memory_space<vmem>>, vector<1x8x8xi8>
    %6 = vector.shape_cast %5 : vector<1x8x8xi8> to vector<8x8xi8>
    %c0_i8 = arith.constant 0 : i8
    %7 = vector.broadcast %c0_i8 : i8 to vector<8x8xi8>
    %8 = arith.cmpi ne, %6, %7 : vector<8x8xi8>
    %c0_6 = arith.constant 0 : index
    %c0_7 = arith.constant 0 : index
    %9 = vector.load %arg6[%c0_6, %c0_7] : memref<32x64xbf16, #tpu.memory_space<vmem>>, vector<32x64xbf16>
    %cst = arith.constant dense<0.000000e+00> : vector<8x64xf32>
    %10 = tpu.matmul %4, %9, %cst {dimension_numbers = #tpu.dot_dimension_numbers<[1], [0], [0], [1], [0, 0, 1, 1], [], []>} : vector<8x32xbf16>, vector<32x64xbf16>, vector<8x64xf32> -> vector<8x64xf32>
    %c0_8 = arith.constant 0 : index
    %c0_9 = arith.constant 0 : index
    %11 = vector.load %arg7[%c0_8, %c0_9] : memref<1x64xf32, #tpu.memory_space<vmem>>, vector<1x64xf32>
    %12 = vector.broadcast %11 : vector<1x64xf32> to vector<8x64xf32>
    %13 = arith.addf %10, %12 : vector<8x64xf32>
    %cst_10 = arith.constant 2.500000e-01 : f32
    %14 = vector.broadcast %cst_10 : f32 to vector<8x64xf32>
    %15 = arith.mulf %13, %14 : vector<8x64xf32>
    %c0_11 = arith.constant 0 : index
    %c0_12 = arith.constant 0 : index
    %16 = vector.load %arg15[%c0_11, %c0_12] : memref<8x64xbf16, #tpu.memory_space<vmem>>, vector<8x64xbf16>
    %c0_13 = arith.constant 0 : index
    %c0_14 = arith.constant 0 : index
    %17 = vector.load %arg16[%c0_13, %c0_14] : memref<8x64xbf16, #tpu.memory_space<vmem>>, vector<8x64xbf16>
    %cst_15 = arith.constant 0.000000e+00 : f32
    %18 = vector.broadcast %cst_15 : f32 to vector<8x32xf32>
    %19 = vector.extract_strided_slice %15 {offsets = [0, 0], sizes = [8, 16], strides = [1, 1]} : vector<8x64xf32> to vector<8x16xf32>
    %20 = arith.truncf %19 : vector<8x16xf32> to vector<8x16xbf16>
    %21 = vector.extract_strided_slice %16 {offsets = [0, 0], sizes = [8, 16], strides = [1, 1]} : vector<8x64xbf16> to vector<8x16xbf16>
    %22 = vector.extract_strided_slice %17 {offsets = [0, 0], sizes = [8, 16], strides = [1, 1]} : vector<8x64xbf16> to vector<8x16xbf16>
    %cst_16 = arith.constant dense<0.000000e+00> : vector<8x8xf32>
    %23 = tpu.matmul %20, %21, %cst_16 {dimension_numbers = #tpu.dot_dimension_numbers<[1], [1], [0], [0], [0, 0, 1, 0], [], []>} : vector<8x16xbf16>, vector<8x16xbf16>, vector<8x8xf32> -> vector<8x8xf32>
    %cst_17 = arith.constant -1.000000e+09 : f32
    %24 = vector.broadcast %cst_17 : f32 to vector<8x8xf32>
    %25 = arith.select %8, %23, %24 : vector<8x8xi1>, vector<8x8xf32>
    %cst_18 = arith.constant dense<0xFF800000> : vector<8xf32>
    %26 = vector.multi_reduction <maximumf>, %25, %cst_18 [1] : vector<8x8xf32> to vector<8xf32>
    %27 = vector.shape_cast %26 : vector<8xf32> to vector<8x1xf32>
    %28 = vector.broadcast %27 : vector<8x1xf32> to vector<8x8xf32>
    %29 = arith.subf %25, %28 : vector<8x8xf32>
    %30 = math.exp %29 : vector<8x8xf32>
    %cst_19 = arith.constant dense<0.000000e+00> : vector<8xf32>
    %31 = vector.multi_reduction <add>, %30, %cst_19 [1] : vector<8x8xf32> to vector<8xf32>
    %32 = vector.shape_cast %31 : vector<8xf32> to vector<8x1xf32>
    %33 = tpu.reciprocal %32 {approx = true} : vector<8x1xf32> -> vector<8x1xf32>
    %34 = vector.broadcast %33 : vector<8x1xf32> to vector<8x8xf32>
    %35 = arith.mulf %30, %34 : vector<8x8xf32>
    %36 = arith.truncf %35 : vector<8x8xf32> to vector<8x8xbf16>
    %cst_20 = arith.constant dense<0.000000e+00> : vector<8x16xf32>
    %37 = tpu.matmul %36, %22, %cst_20 {dimension_numbers = #tpu.dot_dimension_numbers<[1], [0], [0], [1], [0, 0, 1, 1], [], []>} : vector<8x8xbf16>, vector<8x16xbf16>, vector<8x16xf32> -> vector<8x16xf32>
    %c0_21 = arith.constant 0 : index
    %c0_22 = arith.constant 0 : index
    %38 = vector.load %arg12[%c0_21, %c0_22] : memref<64x32xbf16, #tpu.memory_space<vmem>>, vector<16x32xbf16>
    %39 = arith.truncf %37 : vector<8x16xf32> to vector<8x16xbf16>
    %cst_23 = arith.constant dense<0.000000e+00> : vector<8x32xf32>
    %40 = tpu.matmul %39, %38, %cst_23 {dimension_numbers = #tpu.dot_dimension_numbers<[1], [0], [0], [1], [0, 0, 1, 1], [], []>} : vector<8x16xbf16>, vector<16x32xbf16>, vector<8x32xf32> -> vector<8x32xf32>
    %41 = arith.addf %18, %40 : vector<8x32xf32>
    %42 = vector.extract_strided_slice %15 {offsets = [0, 16], sizes = [8, 16], strides = [1, 1]} : vector<8x64xf32> to vector<8x16xf32>
    %43 = arith.truncf %42 : vector<8x16xf32> to vector<8x16xbf16>
    %44 = vector.extract_strided_slice %16 {offsets = [0, 16], sizes = [8, 16], strides = [1, 1]} : vector<8x64xbf16> to vector<8x16xbf16>
    %45 = vector.extract_strided_slice %17 {offsets = [0, 16], sizes = [8, 16], strides = [1, 1]} : vector<8x64xbf16> to vector<8x16xbf16>
    %cst_24 = arith.constant dense<0.000000e+00> : vector<8x8xf32>
    %46 = tpu.matmul %43, %44, %cst_24 {dimension_numbers = #tpu.dot_dimension_numbers<[1], [1], [0], [0], [0, 0, 1, 0], [], []>} : vector<8x16xbf16>, vector<8x16xbf16>, vector<8x8xf32> -> vector<8x8xf32>
    %cst_25 = arith.constant -1.000000e+09 : f32
    %47 = vector.broadcast %cst_25 : f32 to vector<8x8xf32>
    %48 = arith.select %8, %46, %47 : vector<8x8xi1>, vector<8x8xf32>
    %cst_26 = arith.constant dense<0xFF800000> : vector<8xf32>
    %49 = vector.multi_reduction <maximumf>, %48, %cst_26 [1] : vector<8x8xf32> to vector<8xf32>
    %50 = vector.shape_cast %49 : vector<8xf32> to vector<8x1xf32>
    %51 = vector.broadcast %50 : vector<8x1xf32> to vector<8x8xf32>
    %52 = arith.subf %48, %51 : vector<8x8xf32>
    %53 = math.exp %52 : vector<8x8xf32>
    %cst_27 = arith.constant dense<0.000000e+00> : vector<8xf32>
    %54 = vector.multi_reduction <add>, %53, %cst_27 [1] : vector<8x8xf32> to vector<8xf32>
    %55 = vector.shape_cast %54 : vector<8xf32> to vector<8x1xf32>
    %56 = tpu.reciprocal %55 {approx = true} : vector<8x1xf32> -> vector<8x1xf32>
    %57 = vector.broadcast %56 : vector<8x1xf32> to vector<8x8xf32>
    %58 = arith.mulf %53, %57 : vector<8x8xf32>
    %59 = arith.truncf %58 : vector<8x8xf32> to vector<8x8xbf16>
    %cst_28 = arith.constant dense<0.000000e+00> : vector<8x16xf32>
    %60 = tpu.matmul %59, %45, %cst_28 {dimension_numbers = #tpu.dot_dimension_numbers<[1], [0], [0], [1], [0, 0, 1, 1], [], []>} : vector<8x8xbf16>, vector<8x16xbf16>, vector<8x16xf32> -> vector<8x16xf32>
    %c16 = arith.constant 16 : index
    %c0_29 = arith.constant 0 : index
    %61 = vector.load %arg12[%c16, %c0_29] : memref<64x32xbf16, #tpu.memory_space<vmem>>, vector<16x32xbf16>
    %62 = arith.truncf %60 : vector<8x16xf32> to vector<8x16xbf16>
    %cst_30 = arith.constant dense<0.000000e+00> : vector<8x32xf32>
    %63 = tpu.matmul %62, %61, %cst_30 {dimension_numbers = #tpu.dot_dimension_numbers<[1], [0], [0], [1], [0, 0, 1, 1], [], []>} : vector<8x16xbf16>, vector<16x32xbf16>, vector<8x32xf32> -> vector<8x32xf32>
    %64 = arith.addf %41, %63 : vector<8x32xf32>
    %65 = vector.extract_strided_slice %15 {offsets = [0, 32], sizes = [8, 16], strides = [1, 1]} : vector<8x64xf32> to vector<8x16xf32>
    %66 = arith.truncf %65 : vector<8x16xf32> to vector<8x16xbf16>
    %67 = vector.extract_strided_slice %16 {offsets = [0, 32], sizes = [8, 16], strides = [1, 1]} : vector<8x64xbf16> to vector<8x16xbf16>
    %68 = vector.extract_strided_slice %17 {offsets = [0, 32], sizes = [8, 16], strides = [1, 1]} : vector<8x64xbf16> to vector<8x16xbf16>
    %cst_31 = arith.constant dense<0.000000e+00> : vector<8x8xf32>
    %69 = tpu.matmul %66, %67, %cst_31 {dimension_numbers = #tpu.dot_dimension_numbers<[1], [1], [0], [0], [0, 0, 1, 0], [], []>} : vector<8x16xbf16>, vector<8x16xbf16>, vector<8x8xf32> -> vector<8x8xf32>
    %cst_32 = arith.constant -1.000000e+09 : f32
    %70 = vector.broadcast %cst_32 : f32 to vector<8x8xf32>
    %71 = arith.select %8, %69, %70 : vector<8x8xi1>, vector<8x8xf32>
    %cst_33 = arith.constant dense<0xFF800000> : vector<8xf32>
    %72 = vector.multi_reduction <maximumf>, %71, %cst_33 [1] : vector<8x8xf32> to vector<8xf32>
    %73 = vector.shape_cast %72 : vector<8xf32> to vector<8x1xf32>
    %74 = vector.broadcast %73 : vector<8x1xf32> to vector<8x8xf32>
    %75 = arith.subf %71, %74 : vector<8x8xf32>
    %76 = math.exp %75 : vector<8x8xf32>
    %cst_34 = arith.constant dense<0.000000e+00> : vector<8xf32>
    %77 = vector.multi_reduction <add>, %76, %cst_34 [1] : vector<8x8xf32> to vector<8xf32>
    %78 = vector.shape_cast %77 : vector<8xf32> to vector<8x1xf32>
    %79 = tpu.reciprocal %78 {approx = true} : vector<8x1xf32> -> vector<8x1xf32>
    %80 = vector.broadcast %79 : vector<8x1xf32> to vector<8x8xf32>
    %81 = arith.mulf %76, %80 : vector<8x8xf32>
    %82 = arith.truncf %81 : vector<8x8xf32> to vector<8x8xbf16>
    %cst_35 = arith.constant dense<0.000000e+00> : vector<8x16xf32>
    %83 = tpu.matmul %82, %68, %cst_35 {dimension_numbers = #tpu.dot_dimension_numbers<[1], [0], [0], [1], [0, 0, 1, 1], [], []>} : vector<8x8xbf16>, vector<8x16xbf16>, vector<8x16xf32> -> vector<8x16xf32>
    %c32 = arith.constant 32 : index
    %c0_36 = arith.constant 0 : index
    %84 = vector.load %arg12[%c32, %c0_36] : memref<64x32xbf16, #tpu.memory_space<vmem>>, vector<16x32xbf16>
    %85 = arith.truncf %83 : vector<8x16xf32> to vector<8x16xbf16>
    %cst_37 = arith.constant dense<0.000000e+00> : vector<8x32xf32>
    %86 = tpu.matmul %85, %84, %cst_37 {dimension_numbers = #tpu.dot_dimension_numbers<[1], [0], [0], [1], [0, 0, 1, 1], [], []>} : vector<8x16xbf16>, vector<16x32xbf16>, vector<8x32xf32> -> vector<8x32xf32>
    %87 = arith.addf %64, %86 : vector<8x32xf32>
    %88 = vector.extract_strided_slice %15 {offsets = [0, 48], sizes = [8, 16], strides = [1, 1]} : vector<8x64xf32> to vector<8x16xf32>
    %89 = arith.truncf %88 : vector<8x16xf32> to vector<8x16xbf16>
    %90 = vector.extract_strided_slice %16 {offsets = [0, 48], sizes = [8, 16], strides = [1, 1]} : vector<8x64xbf16> to vector<8x16xbf16>
    %91 = vector.extract_strided_slice %17 {offsets = [0, 48], sizes = [8, 16], strides = [1, 1]} : vector<8x64xbf16> to vector<8x16xbf16>
    %cst_38 = arith.constant dense<0.000000e+00> : vector<8x8xf32>
    %92 = tpu.matmul %89, %90, %cst_38 {dimension_numbers = #tpu.dot_dimension_numbers<[1], [1], [0], [0], [0, 0, 1, 0], [], []>} : vector<8x16xbf16>, vector<8x16xbf16>, vector<8x8xf32> -> vector<8x8xf32>
    %cst_39 = arith.constant -1.000000e+09 : f32
    %93 = vector.broadcast %cst_39 : f32 to vector<8x8xf32>
    %94 = arith.select %8, %92, %93 : vector<8x8xi1>, vector<8x8xf32>
    %cst_40 = arith.constant dense<0xFF800000> : vector<8xf32>
    %95 = vector.multi_reduction <maximumf>, %94, %cst_40 [1] : vector<8x8xf32> to vector<8xf32>
    %96 = vector.shape_cast %95 : vector<8xf32> to vector<8x1xf32>
    %97 = vector.broadcast %96 : vector<8x1xf32> to vector<8x8xf32>
    %98 = arith.subf %94, %97 : vector<8x8xf32>
    %99 = math.exp %98 : vector<8x8xf32>
    %cst_41 = arith.constant dense<0.000000e+00> : vector<8xf32>
    %100 = vector.multi_reduction <add>, %99, %cst_41 [1] : vector<8x8xf32> to vector<8xf32>
    %101 = vector.shape_cast %100 : vector<8xf32> to vector<8x1xf32>
    %102 = tpu.reciprocal %101 {approx = true} : vector<8x1xf32> -> vector<8x1xf32>
    %103 = vector.broadcast %102 : vector<8x1xf32> to vector<8x8xf32>
    %104 = arith.mulf %99, %103 : vector<8x8xf32>
    %105 = arith.truncf %104 : vector<8x8xf32> to vector<8x8xbf16>
    %cst_42 = arith.constant dense<0.000000e+00> : vector<8x16xf32>
    %106 = tpu.matmul %105, %91, %cst_42 {dimension_numbers = #tpu.dot_dimension_numbers<[1], [0], [0], [1], [0, 0, 1, 1], [], []>} : vector<8x8xbf16>, vector<8x16xbf16>, vector<8x16xf32> -> vector<8x16xf32>
    %c48 = arith.constant 48 : index
    %c0_43 = arith.constant 0 : index
    %107 = vector.load %arg12[%c48, %c0_43] : memref<64x32xbf16, #tpu.memory_space<vmem>>, vector<16x32xbf16>
    %108 = arith.truncf %106 : vector<8x16xf32> to vector<8x16xbf16>
    %cst_44 = arith.constant dense<0.000000e+00> : vector<8x32xf32>
    %109 = tpu.matmul %108, %107, %cst_44 {dimension_numbers = #tpu.dot_dimension_numbers<[1], [0], [0], [1], [0, 0, 1, 1], [], []>} : vector<8x16xbf16>, vector<16x32xbf16>, vector<8x32xf32> -> vector<8x32xf32>
    %110 = arith.addf %87, %109 : vector<8x32xf32>
    %c0_45 = arith.constant 0 : index
    %c0_46 = arith.constant 0 : index
    %111 = vector.load %arg13[%c0_45, %c0_46] : memref<1x32xf32, #tpu.memory_space<vmem>>, vector<1x32xf32>
    %112 = vector.broadcast %111 : vector<1x32xf32> to vector<8x32xf32>
    %113 = arith.addf %110, %112 : vector<8x32xf32>
    %c0_47 = arith.constant 0 : index
    %c0_48 = arith.constant 0 : index
    %c0_49 = arith.constant 0 : index
    %114 = vector.load %arg14[%c0_47, %c0_48, %c0_49] : memref<1x8x32xf32, #tpu.memory_space<vmem>>, vector<1x8x32xf32>
    %115 = vector.shape_cast %114 : vector<1x8x32xf32> to vector<8x32xf32>
    %116 = vector.shape_cast %113 : vector<8x32xf32> to vector<1x8x32xf32>
    tpu.vector_store %arg14[%c0_47, %c0_48, %c0_49], %116 {strides = array<i32>} : memref<1x8x32xf32, #tpu.memory_space<vmem>>, vector<1x8x32xf32>,
    return
  }
  func.func @transform_0(%arg0: i32, %arg1: i32) -> (i32, i32, i32) {
    %c0_i32 = arith.constant 0 : i32
    %c0_i32_0 = arith.constant 0 : i32
    return %arg0, %arg1, %c0_i32 : i32, i32, i32
  }
  func.func @transform_1(%arg0: i32, %arg1: i32) -> (i32, i32, i32) {
    %c0_i32 = arith.constant 0 : i32
    %c0_i32_0 = arith.constant 0 : i32
    %c0_i32_1 = arith.constant 0 : i32
    return %arg0, %c0_i32, %c0_i32_0 : i32, i32, i32
  }
  func.func @transform_2(%arg0: i32, %arg1: i32) -> (i32, i32, i32) {
    %c0_i32 = arith.constant 0 : i32
    %c0_i32_0 = arith.constant 0 : i32
    %c0_i32_1 = arith.constant 0 : i32
    return %arg0, %c0_i32, %c0_i32_0 : i32, i32, i32
  }
  func.func @transform_3(%arg0: i32, %arg1: i32) -> (i32, i32, i32) {
    %c0_i32 = arith.constant 0 : i32
    %c0_i32_0 = arith.constant 0 : i32
    return %arg0, %arg1, %c0_i32 : i32, i32, i32
  }
  func.func @transform_4(%arg0: i32, %arg1: i32) -> (i32, i32) {
    %c0_i32 = arith.constant 0 : i32
    %c0_i32_0 = arith.constant 0 : i32
    %c0_i32_1 = arith.constant 0 : i32
    return %c0_i32, %c0_i32_0 : i32, i32
  }
  func.func @transform_5(%arg0: i32, %arg1: i32) -> (i32, i32) {
    %c0_i32 = arith.constant 0 : i32
    %c0_i32_0 = arith.constant 0 : i32
    %c0_i32_1 = arith.constant 0 : i32
    return %c0_i32, %c0_i32_0 : i32, i32
  }
  func.func @transform_6(%arg0: i32, %arg1: i32) -> (i32, i32) {
    %c0_i32 = arith.constant 0 : i32
    %c0_i32_0 = arith.constant 0 : i32
    %c0_i32_1 = arith.constant 0 : i32
    return %c0_i32, %c0_i32_0 : i32, i32
  }
  func.func @transform_7(%arg0: i32, %arg1: i32) -> (i32, i32) {
    %c0_i32 = arith.constant 0 : i32
    %c0_i32_0 = arith.constant 0 : i32
    %c0_i32_1 = arith.constant 0 : i32
    return %c0_i32, %c0_i32_0 : i32, i32
  }
  func.func @transform_8(%arg0: i32, %arg1: i32) -> (i32, i32) {
    %c0_i32 = arith.constant 0 : i32
    %c0_i32_0 = arith.constant 0 : i32
    %c0_i32_1 = arith.constant 0 : i32
    return %c0_i32, %c0_i32_0 : i32, i32
  }
  func.func @transform_9(%arg0: i32, %arg1: i32) -> (i32, i32) {
    %c0_i32 = arith.constant 0 : i32
    %c0_i32_0 = arith.constant 0 : i32
    %c0_i32_1 = arith.constant 0 : i32
    return %c0_i32, %c0_i32_0 : i32, i32
  }
  func.func @transform_10(%arg0: i32, %arg1: i32) -> (i32, i32) {
    %c0_i32 = arith.constant 0 : i32
    %c0_i32_0 = arith.constant 0 : i32
    %c0_i32_1 = arith.constant 0 : i32
    return %c0_i32, %c0_i32_0 : i32, i32
  }
  func.func @transform_11(%arg0: i32, %arg1: i32) -> (i32, i32) {
    %c0_i32 = arith.constant 0 : i32
    %c0_i32_0 = arith.constant 0 : i32
    %c0_i32_1 = arith.constant 0 : i32
    return %c0_i32, %c0_i32_0 : i32, i32
  }
  func.func @transform_12(%arg0: i32, %arg1: i32) -> (i32, i32, i32) {
    %c0_i32 = arith.constant 0 : i32
    %c0_i32_0 = arith.constant 0 : i32
    return %arg0, %arg1, %c0_i32 : i32, i32, i32
  }
}

</mosaic_0001>

<llo_original>
// kernel: tpu_custom_call.1
$region0: #{tpu_custom_call.1}
  #allocation0 [shape = 'u32[]', space=smem, size = 0x4, offset = 0x4, fixed_abs, tag = 'smem constant byte address 0x4 - core index']
  #allocation1 [shape = 'u32[144,128]{1,0:T(1,128)}', space=vmem, size = 0x12000, scoped, tag = 'internal scratch']
  #allocation2 [shape = 'bf16[8,64]{1,0:T(8,128)(2,1)}', space=vmem, size = 0x800, scoped, tag = 'scratch operand']
  #allocation3 [shape = 'bf16[8,64]{1,0:T(8,128)(2,1)}', space=vmem, size = 0x800, scoped, tag = 'scratch operand']
  %s0 = inlined_call_operand.hbm [shape: bf16[2,8,32], index: 0, kind: input, shape index: {}]
  %s1 = inlined_call_operand.hbm [shape: bf16[2,8,32], index: 1, kind: input, shape index: {}]
  %s2 = inlined_call_operand.hbm [shape: bf16[2,8,32], index: 2, kind: input, shape index: {}]
  %s3 = inlined_call_operand.hbm [shape: s8[2,8,8], index: 3, kind: input, shape index: {}]
  %s4 = inlined_call_operand.vmem [shape: bf16[32,64], index: 4, kind: input, shape index: {}]
  %s5 = inlined_call_operand.vmem [shape: f32[1,64], index: 5, kind: input, shape index: {}]
  %s6 = inlined_call_operand.vmem [shape: bf16[32,64], index: 6, kind: input, shape index: {}]
  %s7 = inlined_call_operand.vmem [shape: f32[1,64], index: 7, kind: input, shape index: {}]
  %s8 = inlined_call_operand.vmem [shape: bf16[32,64], index: 8, kind: input, shape index: {}]
  %s9 = inlined_call_operand.hbm [shape: f32[1,64], index: 9, kind: input, shape index: {}]
  %s10 = inlined_call_operand.vmem [shape: bf16[64,32], index: 10, kind: input, shape index: {}]
  %s11 = inlined_call_operand.vmem [shape: f32[1,32], index: 11, kind: input, shape index: {}]
  %s12 = inlined_call_operand.hbm [shape: f32[2,8,32], index: 12, kind: output, shape index: {}]
  %s13 = sld [smem:[#allocation0]]
  $region105: #{tpu_custom_call.1} parent=0
    _
  %s15 = ssub.s32 1, %s13
  %s16 = scalar_select 0, %s15, %s13
  $region1: #{tpu_custom_call.1} parent=0
    #allocation4 [shape = 'u8[4096]{0}', space=vmem, size = 0x1000, scoped, tag = 'input window, operand 0']
    #allocation5 [shape = 's32[2]{0}', space=sflag, size = 0x8, scoped, tag = 'scoped memory for tpu_custom_call.1']
    #allocation6 [shape = 's32[2]{0}', space=sflag, size = 0x8, scoped, tag = 'scoped memory for tpu_custom_call.1']
    #allocation7 [shape = 'u8[4096]{0}', space=vmem, size = 0x1000, scoped, tag = 'input window, operand 1']
    #allocation8 [shape = 's32[2]{0}', space=sflag, size = 0x8, scoped, tag = 'scoped memory for tpu_custom_call.1']
    #allocation9 [shape = 'u8[4096]{0}', space=vmem, size = 0x1000, scoped, tag = 'input window, operand 2']
    #allocation10 [shape = 'u8[2048]{0}', space=vmem, size = 0x800, scoped, tag = 'input window, operand 3']
    #allocation11 [shape = 's32[2]{0}', space=sflag, size = 0x8, scoped, tag = 'scoped memory for tpu_custom_call.1']
    #allocation12 [shape = 'u8[512]{0}', space=vmem, size = 0x400, scoped, tag = 'input window, operand 9, single buffered']
    #allocation13 [shape = 'u8[8192]{0}', space=vmem, size = 0x2000, scoped, tag = 'output window, operand 0']
    %17 = vsyncpa [#allocation5], 0
    %s18 = scalar_lea.sflag [#allocation5], 1
    %19 = vsyncpa %s18, 0
    %20 = vsyncpa [#allocation8], 0
    %s21 = scalar_lea.sflag [#allocation8], 1
    %22 = vsyncpa %s21, 0
    %23 = vsyncpa [#allocation11], 0
    %s24 = scalar_lea.sflag [#allocation11], 1
    %25 = vsyncpa %s24, 0
    %26 = vsyncpa [#allocation6], 0
    %s27 = scalar_lea.sflag [#allocation6], 1
    %28 = vsyncpa %s27, 0
    loop: start=0, step=1, limit=4
    $region2: #{tpu_custom_call.1} parent=1 // loop_pre_header
      _
    $region3: #{tpu_custom_call.1} parent=1 // loop_header
      %s30 = sphi 0, %s34
      %p31 = scmp.ge.s32.totalorder %s30, 4
      %s37 = sphi 0, %s49
      %s38 = sphi 0, %s45
      %s39 = sphi 0, %s37
      %s40 = sphi 0, %s38
      %s41 = sphi 0, %s39
      %s42 = sphi 0, %s40
      %s54 = sphi 0, %s56
      %s57 = sphi 0, %s54
      %s58 = sphi 0, %s57
      %s74 = sphi 0, %s58
      %s80 = sphi 0, %s82
      %s83 = sphi 0, %s80
      %s84 = sphi 0, %s83
      %s100 = sphi 0, %s84
      %s106 = sphi 0, %s108
      %s109 = sphi 0, %s106
      %s110 = sphi 0, %s109
      %s126 = sphi 0, %s110
      %s134 = sphi 0, %s136
      %s137 = sphi 0, %s134
      %s138 = sphi 0, %s137
      %s154 = sphi 0, %s138
      %s158 = sphi 0, %s158
      %s160 = sphi 0, %s158
      %s161 = sphi 0, %s160
      %s175 = sphi 0, %s161
      %s179 = sphi 0, %s179
      %s181 = sphi 0, %s179
      %s182 = sphi 0, %s181
      %s196 = sphi 0, %s182
      %s200 = sphi 0, %s200
      %s202 = sphi 0, %s200
      %s203 = sphi 0, %s202
      %s217 = sphi 0, %s203
      %s221 = sphi 0, %s221
      %s223 = sphi 0, %s221
      %s224 = sphi 0, %s223
      %s238 = sphi 0, %s224
      %s242 = sphi 0, %s242
      %s244 = sphi 0, %s242
      %s245 = sphi 0, %s244
      %s259 = sphi 0, %s245
      %s263 = sphi 0, %s263
      %s265 = sphi 0, %s263
      %s266 = sphi 0, %s265
      %s280 = sphi 0, %s266
      %s284 = sphi 0, %s284
      %s286 = sphi 0, %s284
      %s287 = sphi 0, %s286
      %s301 = sphi 0, %s287
      %s305 = sphi 0, %s305
      %s307 = sphi 0, %s305
      %s308 = sphi 0, %s307
      %s322 = sphi 0, %s308
      %s330 = sphi 0, %s332
      %s333 = sphi 0, %s330
      %s334 = sphi 0, %s333
      %s350 = sphi 0, %s334
    $region4: #{tpu_custom_call.1} parent=1 // loop_header_branch
      %33 = sbr.rel (%p31) target = $region8
    $region5: #{tpu_custom_call.1} parent=1 // loop_body
      %s35 = ssub.s32 %s30, 1
      %s36 = ssub.s32 %s30, 2
      %s43 = sadd.s32 1, %s38
      %p44 = scmp.ge.s32.totalorder %s43, 1
      %s45 = scalar_select %p44, 0, %s43
      %s46 = sadd.s32 1, %s37
      %s47 = scalar_select %p44, %s46, %s37
      %p48 = scmp.ge.s32.totalorder %s47, 2
      %s49 = scalar_select %p48, 0, %s47
      %s50 = ssub.s32 %s37, %s49
      %s51 = ssub.s32 %s38, %s45
      %s52 = sor.u32 %s50, %s51
      %p53 = scmp.eq.s32.totalorder %s52, 0
      %s55 = sadd.s32 %s54, 1
      %s56 = scalar_select %p53, %s54, %s55
      %p59 = pneg %p53
      %p60 = scmp.eq.s32.totalorder %s30, 1
      %p61 = por %p59, %p60
      %p62 = scmp.ne.s32.totalorder %s54, %s57
      %p63 = scmp.eq.s32.totalorder %s30, 0
      %p64 = por %p62, %p63
      %p65 = scmp.ne.s32.totalorder %s54, %s57
      %p66 = scmp.eq.s32.totalorder %s35, 1
      %p67 = por %p65, %p66
      %p68 = scmp.ne.s32.totalorder %s57, %s58
      %p69 = scmp.eq.s32.totalorder %s35, 0
      %p70 = por %p68, %p69
      %p71 = scmp.ne.s32.totalorder %s57, %s58
      %p72 = scmp.eq.s32.totalorder %s36, 1
      %p73 = por %p71, %p72
      %p75 = scmp.ne.s32.totalorder %s58, %s74
      %p76 = scmp.eq.s32.totalorder %s36, 0
      %p77 = por %p75, %p76
      %s78 = ssub.s32 %s37, %s49
      %p79 = scmp.eq.s32.totalorder %s78, 0
      %s81 = sadd.s32 %s80, 1
      %s82 = scalar_select %p79, %s80, %s81
      %p85 = pneg %p79
      %p86 = scmp.eq.s32.totalorder %s30, 1
      %p87 = por %p85, %p86
      %p88 = scmp.ne.s32.totalorder %s80, %s83
      %p89 = scmp.eq.s32.totalorder %s30, 0
      %p90 = por %p88, %p89
      %p91 = scmp.ne.s32.totalorder %s80, %s83
      %p92 = scmp.eq.s32.totalorder %s35, 1
      %p93 = por %p91, %p92
      %p94 = scmp.ne.s32.totalorder %s83, %s84
      %p95 = scmp.eq.s32.totalorder %s35, 0
      %p96 = por %p94, %p95
      %p97 = scmp.ne.s32.totalorder %s83, %s84
      %p98 = scmp.eq.s32.totalorder %s36, 1
      %p99 = por %p97, %p98
      %p101 = scmp.ne.s32.totalorder %s84, %s100
      %p102 = scmp.eq.s32.totalorder %s36, 0
      %p103 = por %p101, %p102
      %s104 = ssub.s32 %s37, %s49
      %p105 = scmp.eq.s32.totalorder %s104, 0
      %s107 = sadd.s32 %s106, 1
      %s108 = scalar_select %p105, %s106, %s107
      %p111 = pneg %p105
      %p112 = scmp.eq.s32.totalorder %s30, 1
      %p113 = por %p111, %p112
      %p114 = scmp.ne.s32.totalorder %s106, %s109
      %p115 = scmp.eq.s32.totalorder %s30, 0
      %p116 = por %p114, %p115
      %p117 = scmp.ne.s32.totalorder %s106, %s109
      %p118 = scmp.eq.s32.totalorder %s35, 1
      %p119 = por %p117, %p118
      %p120 = scmp.ne.s32.totalorder %s109, %s110
      %p121 = scmp.eq.s32.totalorder %s35, 0
      %p122 = por %p120, %p121
      %p123 = scmp.ne.s32.totalorder %s109, %s110
      %p124 = scmp.eq.s32.totalorder %s36, 1
      %p125 = por %p123, %p124
      %p127 = scmp.ne.s32.totalorder %s110, %s126
      %p128 = scmp.eq.s32.totalorder %s36, 0
      %p129 = por %p127, %p128
      %s130 = ssub.s32 %s37, %s49
      %s131 = ssub.s32 %s38, %s45
      %s132 = sor.u32 %s130, %s131
      %p133 = scmp.eq.s32.totalorder %s132, 0
      %s135 = sadd.s32 %s134, 1
      %s136 = scalar_select %p133, %s134, %s135
      %p139 = pneg %p133
      %p140 = scmp.eq.s32.totalorder %s30, 1
      %p141 = por %p139, %p140
      %p142 = scmp.ne.s32.totalorder %s134, %s137
      %p143 = scmp.eq.s32.totalorder %s30, 0
      %p144 = por %p142, %p143
      %p145 = scmp.ne.s32.totalorder %s134, %s137
      %p146 = scmp.eq.s32.totalorder %s35, 1
      %p147 = por %p145, %p146
      %p148 = scmp.ne.s32.totalorder %s137, %s138
      %p149 = scmp.eq.s32.totalorder %s35, 0
      %p150 = por %p148, %p149
      %p151 = scmp.ne.s32.totalorder %s137, %s138
      %p152 = scmp.eq.s32.totalorder %s36, 1
      %p153 = por %p151, %p152
      %p155 = scmp.ne.s32.totalorder %s138, %s154
      %p156 = scmp.eq.s32.totalorder %s36, 0
      %p157 = por %p155, %p156
      %s159 = sadd.s32 %s158, 1
      %p162 = scmp.eq.s32.totalorder %s30, 1
      %p163 = scmp.ne.s32.totalorder %s158, %s160
      %p164 = scmp.eq.s32.totalorder %s30, 0
      %p165 = por %p163, %p164
      %p166 = scmp.ne.s32.totalorder %s158, %s160
      %p167 = scmp.eq.s32.totalorder %s35, 1
      %p168 = por %p166, %p167
      %p169 = scmp.ne.s32.totalorder %s160, %s161
      %p170 = scmp.eq.s32.totalorder %s35, 0
      %p171 = por %p169, %p170
      %p172 = scmp.ne.s32.totalorder %s160, %s161
      %p173 = scmp.eq.s32.totalorder %s36, 1
      %p174 = por %p172, %p173
      %p176 = scmp.ne.s32.totalorder %s161, %s175
      %p177 = scmp.eq.s32.totalorder %s36, 0
      %p178 = por %p176, %p177
      %s180 = sadd.s32 %s179, 1
      %p183 = scmp.eq.s32.totalorder %s30, 1
      %p184 = scmp.ne.s32.totalorder %s179, %s181
      %p185 = scmp.eq.s32.totalorder %s30, 0
      %p186 = por %p184, %p185
      %p187 = scmp.ne.s32.totalorder %s179, %s181
      %p188 = scmp.eq.s32.totalorder %s35, 1
      %p189 = por %p187, %p188
      %p190 = scmp.ne.s32.totalorder %s181, %s182
      %p191 = scmp.eq.s32.totalorder %s35, 0
      %p192 = por %p190, %p191
      %p193 = scmp.ne.s32.totalorder %s181, %s182
      %p194 = scmp.eq.s32.totalorder %s36, 1
      %p195 = por %p193, %p194
      %p197 = scmp.ne.s32.totalorder %s182, %s196
      %p198 = scmp.eq.s32.totalorder %s36, 0
      %p199 = por %p197, %p198
      %s201 = sadd.s32 %s200, 1
      %p204 = scmp.eq.s32.totalorder %s30, 1
      %p205 = scmp.ne.s32.totalorder %s200, %s202
      %p206 = scmp.eq.s32.totalorder %s30, 0
      %p207 = por %p205, %p206
      %p208 = scmp.ne.s32.totalorder %s200, %s202
      %p209 = scmp.eq.s32.totalorder %s35, 1
      %p210 = por %p208, %p209
      %p211 = scmp.ne.s32.totalorder %s202, %s203
      %p212 = scmp.eq.s32.totalorder %s35, 0
      %p213 = por %p211, %p212
      %p214 = scmp.ne.s32.totalorder %s202, %s203
      %p215 = scmp.eq.s32.totalorder %s36, 1
      %p216 = por %p214, %p215
      %p218 = scmp.ne.s32.totalorder %s203, %s217
      %p219 = scmp.eq.s32.totalorder %s36, 0
      %p220 = por %p218, %p219
      %s222 = sadd.s32 %s221, 1
      %p225 = scmp.eq.s32.totalorder %s30, 1
      %p226 = scmp.ne.s32.totalorder %s221, %s223
      %p227 = scmp.eq.s32.totalorder %s30, 0
      %p228 = por %p226, %p227
      %p229 = scmp.ne.s32.totalorder %s221, %s223
      %p230 = scmp.eq.s32.totalorder %s35, 1
      %p231 = por %p229, %p230
      %p232 = scmp.ne.s32.totalorder %s223, %s224
      %p233 = scmp.eq.s32.totalorder %s35, 0
      %p234 = por %p232, %p233
      %p235 = scmp.ne.s32.totalorder %s223, %s224
      %p236 = scmp.eq.s32.totalorder %s36, 1
      %p237 = por %p235, %p236
      %p239 = scmp.ne.s32.totalorder %s224, %s238
      %p240 = scmp.eq.s32.totalorder %s36, 0
      %p241 = por %p239, %p240
      %s243 = sadd.s32 %s242, 1
      %p246 = scmp.eq.s32.totalorder %s30, 1
      %p247 = scmp.ne.s32.totalorder %s242, %s244
      %p248 = scmp.eq.s32.totalorder %s30, 0
      %p249 = por %p247, %p248
      %p250 = scmp.ne.s32.totalorder %s242, %s244
      %p251 = scmp.eq.s32.totalorder %s35, 1
      %p252 = por %p250, %p251
      %p253 = scmp.ne.s32.totalorder %s244, %s245
      %p254 = scmp.eq.s32.totalorder %s35, 0
      %p255 = por %p253, %p254
      %p256 = scmp.ne.s32.totalorder %s244, %s245
      %p257 = scmp.eq.s32.totalorder %s36, 1
      %p258 = por %p256, %p257
      %p260 = scmp.ne.s32.totalorder %s245, %s259
      %p261 = scmp.eq.s32.totalorder %s36, 0
      %p262 = por %p260, %p261
      %s264 = sadd.s32 %s263, 1
      %p267 = scmp.eq.s32.totalorder %s30, 1
      %p268 = scmp.ne.s32.totalorder %s263, %s265
      %p269 = scmp.eq.s32.totalorder %s30, 0
      %p270 = por %p268, %p269
      %p271 = scmp.ne.s32.totalorder %s263, %s265
      %p272 = scmp.eq.s32.totalorder %s35, 1
      %p273 = por %p271, %p272
      %p274 = scmp.ne.s32.totalorder %s265, %s266
      %p275 = scmp.eq.s32.totalorder %s35, 0
      %p276 = por %p274, %p275
      %p277 = scmp.ne.s32.totalorder %s265, %s266
      %p278 = scmp.eq.s32.totalorder %s36, 1
      %p279 = por %p277, %p278
      %p281 = scmp.ne.s32.totalorder %s266, %s280
      %p282 = scmp.eq.s32.totalorder %s36, 0
      %p283 = por %p281, %p282
      %s285 = sadd.s32 %s284, 1
      %p288 = scmp.eq.s32.totalorder %s30, 1
      %p289 = scmp.ne.s32.totalorder %s284, %s286
      %p290 = scmp.eq.s32.totalorder %s30, 0
      %p291 = por %p289, %p290
      %p292 = scmp.ne.s32.totalorder %s284, %s286
      %p293 = scmp.eq.s32.totalorder %s35, 1
      %p294 = por %p292, %p293
      %p295 = scmp.ne.s32.totalorder %s286, %s287
      %p296 = scmp.eq.s32.totalorder %s35, 0
      %p297 = por %p295, %p296
      %p298 = scmp.ne.s32.totalorder %s286, %s287
      %p299 = scmp.eq.s32.totalorder %s36, 1
      %p300 = por %p298, %p299
      %p302 = scmp.ne.s32.totalorder %s287, %s301
      %p303 = scmp.eq.s32.totalorder %s36, 0
      %p304 = por %p302, %p303
      %s306 = sadd.s32 %s305, 1
      %p309 = scmp.eq.s32.totalorder %s30, 1
      %p310 = scmp.ne.s32.totalorder %s305, %s307
      %p311 = scmp.eq.s32.totalorder %s30, 0
      %p312 = por %p310, %p311
      %p313 = scmp.ne.s32.totalorder %s305, %s307
      %p314 = scmp.eq.s32.totalorder %s35, 1
      %p315 = por %p313, %p314
      %p316 = scmp.ne.s32.totalorder %s307, %s308
      %p317 = scmp.eq.s32.totalorder %s35, 0
      %p318 = por %p316, %p317
      %p319 = scmp.ne.s32.totalorder %s307, %s308
      %p320 = scmp.eq.s32.totalorder %s36, 1
      %p321 = por %p319, %p320
      %p323 = scmp.ne.s32.totalorder %s308, %s322
      %p324 = scmp.eq.s32.totalorder %s36, 0
      %p325 = por %p323, %p324
      %s326 = ssub.s32 %s37, %s49
      %s327 = ssub.s32 %s38, %s45
      %s328 = sor.u32 %s326, %s327
      %p329 = scmp.eq.s32.totalorder %s328, 0
      %s331 = sadd.s32 %s330, 1
      %s332 = scalar_select %p329, %s330, %s331
      %p335 = pneg %p329
      %p336 = scmp.eq.s32.totalorder %s30, 1
      %p337 = por %p335, %p336
      %p338 = scmp.ne.s32.totalorder %s330, %s333
      %p339 = scmp.eq.s32.totalorder %s30, 0
      %p340 = por %p338, %p339
      %p341 = scmp.ne.s32.totalorder %s330, %s333
      %p342 = scmp.eq.s32.totalorder %s35, 1
      %p343 = por %p341, %p342
      %p344 = scmp.ne.s32.totalorder %s333, %s334
      %p345 = scmp.eq.s32.totalorder %s35, 0
      %p346 = por %p344, %p345
      %p347 = scmp.ne.s32.totalorder %s333, %s334
      %p348 = scmp.eq.s32.totalorder %s36, 1
      %p349 = por %p347, %p348
      %p351 = scmp.ne.s32.totalorder %s334, %s350
      %p352 = scmp.eq.s32.totalorder %s36, 0
      %p353 = por %p351, %p352
      %p354 = scmp.le.s32.totalorder 1, %s30
      %p355 = scmp.lt.s32.totalorder %s30, 3
      %p356 = pnand %p354, %p355
      %p357 = pneg %p356
      // Predicated region
      $region9: #{tpu_custom_call.1} parent=5 // pred_check
        _
      $region10: #{tpu_custom_call.1} parent=5 // pred_check_branch
        %359 = sbr.rel (%p356) target = $region12
      $region11: #{tpu_custom_call.1} parent=5 // pred_region
        %s360 = ssub.s32 %s30, 1
        // Predicated region
        $region13: #{tpu_custom_call.1} parent=11 // pred_check
          %p361 = pneg %p171
        $region14: #{tpu_custom_call.1} parent=11 // pred_check_branch
          %363 = sbr.rel (%p361) target = $region16
        $region15: #{tpu_custom_call.1} parent=11 // pred_region
          _
        $region16: #{tpu_custom_call.1} parent=11 // pred_fallthru
          _
        // Predicated region
        $region17: #{tpu_custom_call.1} parent=11 // pred_check
          %p364 = pneg %p192
        $region18: #{tpu_custom_call.1} parent=11 // pred_check_branch
          %366 = sbr.rel (%p364) target = $region20
        $region19: #{tpu_custom_call.1} parent=11 // pred_region
          _
        $region20: #{tpu_custom_call.1} parent=11 // pred_fallthru
          _
        // Predicated region
        $region21: #{tpu_custom_call.1} parent=11 // pred_check
          %p367 = pneg %p213
        $region22: #{tpu_custom_call.1} parent=11 // pred_check_branch
          %369 = sbr.rel (%p367) target = $region24
        $region23: #{tpu_custom_call.1} parent=11 // pred_region
          _
        $region24: #{tpu_custom_call.1} parent=11 // pred_fallthru
          _
        // Predicated region
        $region25: #{tpu_custom_call.1} parent=11 // pred_check
          %p370 = pneg %p234
        $region26: #{tpu_custom_call.1} parent=11 // pred_check_branch
          %372 = sbr.rel (%p370) target = $region28
        $region27: #{tpu_custom_call.1} parent=11 // pred_region
          _
        $region28: #{tpu_custom_call.1} parent=11 // pred_fallthru
          _
        // Predicated region
        $region29: #{tpu_custom_call.1} parent=11 // pred_check
          %p373 = pneg %p255
        $region30: #{tpu_custom_call.1} parent=11 // pred_check_branch
          %375 = sbr.rel (%p373) target = $region32
        $region31: #{tpu_custom_call.1} parent=11 // pred_region
          _
        $region32: #{tpu_custom_call.1} parent=11 // pred_fallthru
          _
        // Predicated region
        $region33: #{tpu_custom_call.1} parent=11 // pred_check
          %p376 = pneg %p276
        $region34: #{tpu_custom_call.1} parent=11 // pred_check_branch
          %378 = sbr.rel (%p376) target = $region36
        $region35: #{tpu_custom_call.1} parent=11 // pred_region
          %s380 = ssub.s32 16, 16
          %381 = vsyncadd [#allocation11], %s380
          %s383 = sshll.u32 [#allocation12], 4
          %s384 = int_to_ptr.vmem [resolvable:$true] %s383
          %386 = dma.hbm_to_vmem [thread:$0]  %s9, 16, %s384, [#allocation11]
        $region36: #{tpu_custom_call.1} parent=11 // pred_fallthru
          _
        // Predicated region
        $region37: #{tpu_custom_call.1} parent=11 // pred_check
          %p387 = pneg %p297
        $region38: #{tpu_custom_call.1} parent=11 // pred_check_branch
          %389 = sbr.rel (%p387) target = $region40
        $region39: #{tpu_custom_call.1} parent=11 // pred_region
          _
        $region40: #{tpu_custom_call.1} parent=11 // pred_fallthru
          _
        // Predicated region
        $region41: #{tpu_custom_call.1} parent=11 // pred_check
          %p390 = pneg %p318
        $region42: #{tpu_custom_call.1} parent=11 // pred_check_branch
          %392 = sbr.rel (%p390) target = $region44
        $region43: #{tpu_custom_call.1} parent=11 // pred_region
          _
        $region44: #{tpu_custom_call.1} parent=11 // pred_fallthru
          _
      $region12: #{tpu_custom_call.1} parent=5 // pred_fallthru
        _
      %p393 = scmp.lt.s32.totalorder %s30, 2
      // Predicated region
      $region45: #{tpu_custom_call.1} parent=5 // pred_check
        %p394 = pneg %p393
      $region46: #{tpu_custom_call.1} parent=5 // pred_check_branch
        %396 = sbr.rel (%p394) target = $region48
      $region47: #{tpu_custom_call.1} parent=5 // pred_region
        // Predicated region
        $region49: #{tpu_custom_call.1} parent=47 // pred_check
          %p397 = pneg %p64
        $region50: #{tpu_custom_call.1} parent=47 // pred_check_branch
          %399 = sbr.rel (%p397) target = $region52
        $region51: #{tpu_custom_call.1} parent=47 // pred_region
          %s400 = sand.u32 %s54, 1
          %s401 = scalar_lea.sflag [#allocation5], %s400
          %s402 = sand.u32 %s54, 1
          %s403 = smul.addr %s402, 4
          %s404 = scalar_lea.vmem [#allocation4], %s403
          %s406 = ssub.s32 64, 64
          %407 = vsyncadd %s401, %s406
          %s408 = sadd.s32 %s38, %s37
          %s409 = smul.addr %s408, 64
          %s410 = scalar_lea.hbm %s0, %s409
          %s412 = sshll.u32 %s404, 4
          %s413 = int_to_ptr.vmem [resolvable:$true] %s412
          %415 = dma.hbm_to_vmem [thread:$0]  %s410, 64, %s413, %s401
        $region52: #{tpu_custom_call.1} parent=47 // pred_fallthru
          _
        // Predicated region
        $region53: #{tpu_custom_call.1} parent=47 // pred_check
          %p416 = pneg %p90
        $region54: #{tpu_custom_call.1} parent=47 // pred_check_branch
          %418 = sbr.rel (%p416) target = $region56
        $region55: #{tpu_custom_call.1} parent=47 // pred_region
          %s419 = sand.u32 %s30, 1
          %s420 = scalar_lea.sflag [#allocation8], %s419
          %s421 = sand.u32 %s80, 1
          %s422 = smul.addr %s421, 4
          %s423 = scalar_lea.vmem [#allocation7], %s422
          %s425 = ssub.s32 64, 64
          %426 = vsyncadd %s420, %s425
          %s427 = smul.addr %s37, 64
          %s428 = scalar_lea.hbm %s1, %s427
          %s430 = sshll.u32 %s423, 4
          %s431 = int_to_ptr.vmem [resolvable:$true] %s430
          %433 = dma.hbm_to_vmem [thread:$0]  %s428, 64, %s431, %s420
        $region56: #{tpu_custom_call.1} parent=47 // pred_fallthru
          _
        // Predicated region
        $region57: #{tpu_custom_call.1} parent=47 // pred_check
          %p434 = pneg %p116
        $region58: #{tpu_custom_call.1} parent=47 // pred_check_branch
          %436 = sbr.rel (%p434) target = $region60
        $region59: #{tpu_custom_call.1} parent=47 // pred_region
          %s437 = sand.u32 %s30, 1
          %s438 = scalar_lea.sflag [#allocation8], %s437
          %s439 = sand.u32 %s106, 1
          %s440 = smul.addr %s439, 4
          %s441 = scalar_lea.vmem [#allocation9], %s440
          %s443 = ssub.s32 64, 64
          %444 = vsyncadd %s438, %s443
          %s445 = smul.addr %s37, 64
          %s446 = scalar_lea.hbm %s2, %s445
          %s448 = sshll.u32 %s441, 4
          %s449 = int_to_ptr.vmem [resolvable:$true] %s448
          %451 = dma.hbm_to_vmem [thread:$0]  %s446, 64, %s449, %s438
        $region60: #{tpu_custom_call.1} parent=47 // pred_fallthru
          _
        // Predicated region
        $region61: #{tpu_custom_call.1} parent=47 // pred_check
          %p452 = pneg %p144
        $region62: #{tpu_custom_call.1} parent=47 // pred_check_branch
          %454 = sbr.rel (%p452) target = $region64
        $region63: #{tpu_custom_call.1} parent=47 // pred_region
          %s455 = sand.u32 %s30, 1
          %s456 = scalar_lea.sflag [#allocation11], %s455
          %s457 = sand.u32 %s134, 1
          %s458 = smul.addr %s457, 2
          %s459 = scalar_lea.vmem [#allocation10], %s458
          %s461 = ssub.s32 32, 32
          %462 = vsyncadd %s456, %s461
          %s463 = sadd.s32 %s38, %s37
          %s464 = smul.addr %s463, 32
          %s465 = scalar_lea.hbm %s3, %s464
          %s467 = sshll.u32 %s459, 4
          %s468 = int_to_ptr.vmem [resolvable:$true] %s467
          %470 = dma.hbm_to_vmem [thread:$0]  %s465, 32, %s468, %s456
        $region64: #{tpu_custom_call.1} parent=47 // pred_fallthru
          _
      $region48: #{tpu_custom_call.1} parent=5 // pred_fallthru
        _
      %p471 = scmp.le.s32.totalorder 1, %s30
      %p472 = scmp.lt.s32.totalorder %s30, 3
      %p473 = pnand %p471, %p472
      %p474 = pneg %p473
      // Predicated region
      $region65: #{tpu_custom_call.1} parent=5 // pred_check
        _
      $region66: #{tpu_custom_call.1} parent=5 // pred_check_branch
        %476 = sbr.rel (%p473) target = $region68
      $region67: #{tpu_custom_call.1} parent=5 // pred_region
        %s477 = ssub.s32 %s30, 1
        %s478 = sand.u32 %s57, 1
        %s479 = scalar_lea.sflag [#allocation5], %s478
        %s480 = sand.u32 %s57, 1
        %s481 = smul.addr %s480, 4
        %s482 = scalar_lea.vmem [#allocation4], %s481
        // Predicated region
        $region69: #{tpu_custom_call.1} parent=67 // pred_check
          %p483 = pneg %p70
        $region70: #{tpu_custom_call.1} parent=67 // pred_check_branch
          %485 = sbr.rel (%p483) target = $region72
        $region71: #{tpu_custom_call.1} parent=67 // pred_region
          %486 = dma.done %s479, 64
        $region72: #{tpu_custom_call.1} parent=67 // pred_fallthru
          _
        %s487 = sand.u32 %s35, 1
        %s488 = scalar_lea.sflag [#allocation8], %s487
        %s489 = sand.u32 %s83, 1
        %s490 = smul.addr %s489, 4
        %s491 = scalar_lea.vmem [#allocation7], %s490
        // Predicated region
        $region73: #{tpu_custom_call.1} parent=67 // pred_check
          %p492 = pneg %p96
        $region74: #{tpu_custom_call.1} parent=67 // pred_check_branch
          %494 = sbr.rel (%p492) target = $region76
        $region75: #{tpu_custom_call.1} parent=67 // pred_region
          %495 = dma.done %s488, 64
        $region76: #{tpu_custom_call.1} parent=67 // pred_fallthru
          _
        %s496 = sand.u32 %s35, 1
        %s497 = scalar_lea.sflag [#allocation8], %s496
        %s498 = sand.u32 %s109, 1
        %s499 = smul.addr %s498, 4
        %s500 = scalar_lea.vmem [#allocation9], %s499
        // Predicated region
        $region77: #{tpu_custom_call.1} parent=67 // pred_check
          %p501 = pneg %p122
        $region78: #{tpu_custom_call.1} parent=67 // pred_check_branch
          %503 = sbr.rel (%p501) target = $region80
        $region79: #{tpu_custom_call.1} parent=67 // pred_region
          %504 = dma.done %s497, 64
        $region80: #{tpu_custom_call.1} parent=67 // pred_fallthru
          _
        %s505 = sand.u32 %s35, 1
        %s506 = scalar_lea.sflag [#allocation11], %s505
        %s507 = sand.u32 %s137, 1
        %s508 = smul.addr %s507, 2
        %s509 = scalar_lea.vmem [#allocation10], %s508
        // Predicated region
        $region81: #{tpu_custom_call.1} parent=67 // pred_check
          %p510 = pneg %p150
        $region82: #{tpu_custom_call.1} parent=67 // pred_check_branch
          %512 = sbr.rel (%p510) target = $region84
        $region83: #{tpu_custom_call.1} parent=67 // pred_region
          %513 = dma.done %s506, 32
        $region84: #{tpu_custom_call.1} parent=67 // pred_fallthru
          _
        // Predicated region
        $region85: #{tpu_custom_call.1} parent=67 // pred_check
          %p514 = pneg %p276
        $region86: #{tpu_custom_call.1} parent=67 // pred_check_branch
          %516 = sbr.rel (%p514) target = $region88
        $region87: #{tpu_custom_call.1} parent=67 // pred_region
          %517 = dma.done [#allocation11], 16
        $region88: #{tpu_custom_call.1} parent=67 // pred_fallthru
          _
        %s518 = sand.u32 %s57, 1
        %s519 = scalar_lea.sflag [#allocation5], %s518
        %s520 = sand.u32 %s57, 1
        %s521 = smul.addr %s520, 4
        %s522 = scalar_lea.vmem [#allocation4], %s521
        %p523 = pneg %p70
        %p524 = pneg %p67
        %s525 = sand.u32 %s35, 1
        %s526 = scalar_lea.sflag [#allocation8], %s525
        %s527 = sand.u32 %s83, 1
        %s528 = smul.addr %s527, 4
        %s529 = scalar_lea.vmem [#allocation7], %s528
        %p530 = pneg %p96
        %p531 = pneg %p93
        %s532 = sand.u32 %s35, 1
        %s533 = scalar_lea.sflag [#allocation8], %s532
        %s534 = sand.u32 %s109, 1
        %s535 = smul.addr %s534, 4
        %s536 = scalar_lea.vmem [#allocation9], %s535
        %p537 = pneg %p122
        %p538 = pneg %p119
        %s539 = sand.u32 %s35, 1
        %s540 = scalar_lea.sflag [#allocation11], %s539
        %s541 = sand.u32 %s137, 1
        %s542 = smul.addr %s541, 2
        %s543 = scalar_lea.vmem [#allocation10], %s542
        %p544 = pneg %p150
        %p545 = pneg %p147
        %p546 = pneg %p171
        %p547 = pneg %p168
        %p548 = pneg %p192
        %p549 = pneg %p189
        %p550 = pneg %p213
        %p551 = pneg %p210
        %p552 = pneg %p234
        %p553 = pneg %p231
        %p554 = pneg %p255
        %p555 = pneg %p252
        %p556 = pneg %p276
        %p557 = pneg %p273
        %p558 = pneg %p297
        %p559 = pneg %p294
        %p560 = pneg %p318
        %p561 = pneg %p315
        %p562 = pneg %p346
        %p563 = pneg %p343
        %s564 = sand.u32 %s333, 1
        %s565 = scalar_lea.sflag [#allocation6], %s564
        %s566 = sand.u32 %s333, 1
        %s567 = smul.addr %s566, 8
        %s568 = scalar_lea.vmem [#allocation13], %s567
        %p572 = scmp.eq.s32.totalorder %s40, 0
        // Predicated region
        $region89: #{tpu_custom_call.1} parent=67 // pred_check
          %p573 = pneg %p572
        $region90: #{tpu_custom_call.1} parent=67 // pred_check_branch
          %575 = sbr.rel (%p573) target = $region92
        $region91: #{tpu_custom_call.1} parent=67 // pred_region
          %v576 = vld [vmem:[%s491] sm:$0xf]
          %v577 = vld [vmem:[%s500] sm:$0xf]
          %v578 = vld [vmem:[%s6] sm:$0xf]
          %v579 = vld [vmem:[%s6 + $0x4] sm:$0xf]
          %v580 = vld [vmem:[%s6 + $0x8] sm:$0xf]
          %v581 = vld [vmem:[%s6 + $0xc] sm:$0xf]
          %v582 = vld [vmem:[%s7] sm:$0x1]
          %v584 = vlaneseq
          %v585 = vshrl.u32 %v584, 7
          %v586 = vsub.s32 0, %v585
          %v587 = vrot.slane %v582, %v586
          %v593 = vunpack.c.l.b16 %v578
          %v594 = vunpack.c.l.b16 %v579
          %v595 = vunpack.c.l.b16 %v580
          %v596 = vunpack.c.l.b16 %v581
          %v597 = vpack.c.b16 %v594, %v593
          %v598 = vpack.c.b16 %v596, %v595
          %vm601 = vcmask 261120
          %v603 = vsel %vm601, %v576, 0
          %605 = vmatprep.subr.bf16.mxu0 0
          %606 = vmatpush1.bf16.msra.mxu0 0
          %607 = vmatprep.subr.bf16.mxu0 0
          %608 = vmatpush1.bf16.msra.mxu0 0
          %609 = vmatprep.subr.bf16.mxu0 0
          %610 = vmatpush1.bf16.msra.mxu0 0
          %611 = vmatprep.subr.bf16.mxu0 0
          %612 = vmatpush1.bf16.msra.mxu0 0
          %613 = vmatprep.subr.bf16.mxu0 0
          %614 = vmatpush1.bf16.msra.mxu0 0
          %615 = vmatprep.subr.bf16.mxu0 0
          %616 = vmatpush1.bf16.msra.mxu0 0
          %617 = vmatprep.subr.bf16.mxu0 0
          %618 = vmatpush1.bf16.msra.mxu0 %v598
          %619 = vmatprep.subr.bf16.mxu0 0
          %620 = vmatpush1.bf16.msra.mxu0 %v597
          %621 = vmatprep.subr.bf16.mxu0 0
          %622 = vmatpush2.bf16.msra.mxu0 0
          %623 = vmatprep.subr.bf16.mxu0 0
          %624 = vmatpush2.bf16.msra.mxu0 0
          %625 = vmatprep.subr.bf16.mxu0 0
          %626 = vmatpush2.bf16.msra.mxu0 0
          %627 = vmatprep.subr.bf16.mxu0 0
          %628 = vmatpush2.bf16.msra.mxu0 0
          %629 = vmatprep.subr.bf16.mxu0 0
          %630 = vmatpush2.bf16.msra.mxu0 0
          %631 = vmatprep.subr.bf16.mxu0 0
          %632 = vmatpush2.bf16.msra.mxu0 0
          %633 = vmatprep.subr.bf16.mxu0 0
          %634 = vmatpush2.bf16.msra.mxu0 0
          %635 = vmatprep.subr.bf16.mxu0 0
          %636 = vmatpush2.bf16.msra.mxu0 0
          %637 = vmatprep.mubr.bf16.mxu0 0
          %638 = vmatmul.mubr.bf16.gmra.mxu0 %v603
          %v639 = vpop.f32.mrf.mxu0
          %v640 = vadd.f32 %v587, %v639
          %v641 = vpop.f32.mrf.mxu0
          %v642 = vpop.f32.mrf.mxu0
          %v643 = vpop.f32.mrf.mxu0
          %644 = vdwg.mxu0
          %v645 = vld [vmem:[%s8] sm:$0xf]
          %v646 = vld [vmem:[%s8 + $0x4] sm:$0xf]
          %v647 = vld [vmem:[%s8 + $0x8] sm:$0xf]
          %v648 = vld [vmem:[%s8 + $0xc] sm:$0xf]
          %v649 = vld [vmem:[#allocation12] sm:$0x1]
          %v651 = vlaneseq
          %v652 = vshrl.u32 %v651, 7
          %v653 = vsub.s32 0, %v652
          %v654 = vrot.slane %v649, %v653
          %v660 = vunpack.c.l.b16 %v645
          %v661 = vunpack.c.l.b16 %v646
          %v662 = vunpack.c.l.b16 %v647
          %v663 = vunpack.c.l.b16 %v648
          %v664 = vpack.c.b16 %v661, %v660
          %v665 = vpack.c.b16 %v663, %v662
          %v669 = vsel %vm601, %v577, 0
          %671 = vmatprep.subr.bf16.mxu0 0
          %672 = vmatpush1.bf16.msra.mxu0 0
          %673 = vmatprep.subr.bf16.mxu0 0
          %674 = vmatpush1.bf16.msra.mxu0 0
          %675 = vmatprep.subr.bf16.mxu0 0
          %676 = vmatpush1.bf16.msra.mxu0 0
          %677 = vmatprep.subr.bf16.mxu0 0
          %678 = vmatpush1.bf16.msra.mxu0 0
          %679 = vmatprep.subr.bf16.mxu0 0
          %680 = vmatpush1.bf16.msra.mxu0 0
          %681 = vmatprep.subr.bf16.mxu0 0
          %682 = vmatpush1.bf16.msra.mxu0 0
          %683 = vmatprep.subr.bf16.mxu0 0
          %684 = vmatpush1.bf16.msra.mxu0 %v665
          %685 = vmatprep.subr.bf16.mxu0 0
          %686 = vmatpush1.bf16.msra.mxu0 %v664
          %687 = vmatprep.subr.bf16.mxu0 0
          %688 = vmatpush2.bf16.msra.mxu0 0
          %689 = vmatprep.subr.bf16.mxu0 0
          %690 = vmatpush2.bf16.msra.mxu0 0
          %691 = vmatprep.subr.bf16.mxu0 0
          %692 = vmatpush2.bf16.msra.mxu0 0
          %693 = vmatprep.subr.bf16.mxu0 0
          %694 = vmatpush2.bf16.msra.mxu0 0
          %695 = vmatprep.subr.bf16.mxu0 0
          %696 = vmatpush2.bf16.msra.mxu0 0
          %697 = vmatprep.subr.bf16.mxu0 0
          %698 = vmatpush2.bf16.msra.mxu0 0
          %699 = vmatprep.subr.bf16.mxu0 0
          %700 = vmatpush2.bf16.msra.mxu0 0
          %701 = vmatprep.subr.bf16.mxu0 0
          %702 = vmatpush2.bf16.msra.mxu0 0
          %703 = vmatprep.mubr.bf16.mxu0 0
          %704 = vmatmul.mubr.bf16.gmra.mxu0 %v669
          %v705 = vpop.f32.mrf.mxu0
          %v706 = vadd.f32 %v654, %v705
          %v707 = vpop.f32.mrf.mxu0
          %v708 = vpop.f32.mrf.mxu0
          %v709 = vpop.f32.mrf.mxu0
          %710 = vdwg.mxu0
          %v711 = vpack.c.bf16 %v640, %v640
          %vm712 = vcmask 519168
          %713 = vst.msk [vmem:[#allocation2] sm:$0xf] %vm712, %v711
          %v714 = vpack.c.bf16 %v706, %v706
          %715 = vst.msk [vmem:[#allocation3] sm:$0xf] %vm712, %v714
        $region92: #{tpu_custom_call.1} parent=67 // pred_fallthru
          _
        %v716 = vld [vmem:[%s482] sm:$0xf]
        %v717 = vld [vmem:[%s509] sm:$0x3]
        %vm718 = vnez %v717
        %v719 = vld [vmem:[%s4] sm:$0xf]
        %v720 = vld [vmem:[%s4 + $0x4] sm:$0xf]
        %v721 = vld [vmem:[%s4 + $0x8] sm:$0xf]
        %v722 = vld [vmem:[%s4 + $0xc] sm:$0xf]
        %v723 = vld [vmem:[%s5] sm:$0x1]
        %v725 = vlaneseq
        %v726 = vshrl.u32 %v725, 7
        %v727 = vsub.s32 0, %v726
        %v728 = vrot.slane %v723, %v727
        %v734 = vunpack.c.l.b16 %v719
        %v735 = vunpack.c.l.b16 %v720
        %v736 = vunpack.c.l.b16 %v721
        %v737 = vunpack.c.l.b16 %v722
        %v738 = vpack.c.b16 %v735, %v734
        %v739 = vpack.c.b16 %v737, %v736
        %vm742 = vcmask 261120
        %v744 = vsel %vm742, %v716, 0
        %746 = vmatprep.subr.bf16.mxu0 0
        %747 = vmatpush1.bf16.msra.mxu0 0
        %748 = vmatprep.subr.bf16.mxu0 0
        %749 = vmatpush1.bf16.msra.mxu0 0
        %750 = vmatprep.subr.bf16.mxu0 0
        %751 = vmatpush1.bf16.msra.mxu0 0
        %752 = vmatprep.subr.bf16.mxu0 0
        %753 = vmatpush1.bf16.msra.mxu0 0
        %754 = vmatprep.subr.bf16.mxu0 0
        %755 = vmatpush1.bf16.msra.mxu0 0
        %756 = vmatprep.subr.bf16.mxu0 0
        %757 = vmatpush1.bf16.msra.mxu0 0
        %758 = vmatprep.subr.bf16.mxu0 0
        %759 = vmatpush1.bf16.msra.mxu0 %v739
        %760 = vmatprep.subr.bf16.mxu0 0
        %761 = vmatpush1.bf16.msra.mxu0 %v738
        %762 = vmatprep.subr.bf16.mxu0 0
        %763 = vmatpush2.bf16.msra.mxu0 0
        %764 = vmatprep.subr.bf16.mxu0 0
        %765 = vmatpush2.bf16.msra.mxu0 0
        %766 = vmatprep.subr.bf16.mxu0 0
        %767 = vmatpush2.bf16.msra.mxu0 0
        %768 = vmatprep.subr.bf16.mxu0 0
        %769 = vmatpush2.bf16.msra.mxu0 0
        %770 = vmatprep.subr.bf16.mxu0 0
        %771 = vmatpush2.bf16.msra.mxu0 0
        %772 = vmatprep.subr.bf16.mxu0 0
        %773 = vmatpush2.bf16.msra.mxu0 0
        %774 = vmatprep.subr.bf16.mxu0 0
        %775 = vmatpush2.bf16.msra.mxu0 0
        %776 = vmatprep.subr.bf16.mxu0 0
        %777 = vmatpush2.bf16.msra.mxu0 0
        %778 = vmatprep.mubr.bf16.mxu0 0
        %779 = vmatmul.mubr.bf16.gmra.mxu0 %v744
        %v780 = vpop.f32.mrf.mxu0
        %v781 = vadd.f32 %v728, %v780
        %v782 = vpop.f32.mrf.mxu0
        %v783 = vpop.f32.mrf.mxu0
        %v784 = vpop.f32.mrf.mxu0
        %785 = vdwg.mxu0
        %v786 = vmul.f32 %v781, 0.25
        %v787 = vld [vmem:[#allocation2] sm:$0xf]
        %v788 = vld [vmem:[#allocation3] sm:$0xf]
        %v789 = vpack.c.bf16 %v786, %v786
        %vm790 = vcmask 130048
        %v792 = vsel %vm790, %v789, 0
        %v795 = vsel %vm790, %v787, 0
        %797 = vmatprep.subr.bf16.mxu0 0
        %798 = vmatpush1.bf16.xpose.msra.mxu0 0
        %799 = vmatprep.subr.bf16.mxu0 0
        %800 = vmatpush1.bf16.xpose.msra.mxu0 0
        %801 = vmatprep.subr.bf16.mxu0 0
        %802 = vmatpush1.bf16.xpose.msra.mxu0 0
        %803 = vmatprep.subr.bf16.mxu0 0
        %804 = vmatpush1.bf16.xpose.msra.mxu0 0
        %805 = vmatprep.subr.bf16.mxu0 0
        %806 = vmatpush1.bf16.xpose.msra.mxu0 0
        %807 = vmatprep.subr.bf16.mxu0 0
        %808 = vmatpush1.bf16.xpose.msra.mxu0 0
        %809 = vmatprep.subr.bf16.mxu0 0
        %810 = vmatpush1.bf16.xpose.msra.mxu0 0
        %811 = vmatprep.subr.bf16.mxu0 0
        %812 = vmatpush1.bf16.xpose.msra.mxu0 %v795
        %813 = vmatprep.subr.bf16.mxu0 0
        %814 = vmatpush2.bf16.xpose.msra.mxu0 0
        %815 = vmatprep.subr.bf16.mxu0 0
        %816 = vmatpush2.bf16.xpose.msra.mxu0 0
        %817 = vmatprep.subr.bf16.mxu0 0
        %818 = vmatpush2.bf16.xpose.msra.mxu0 0
        %819 = vmatprep.subr.bf16.mxu0 0
        %820 = vmatpush2.bf16.xpose.msra.mxu0 0
        %821 = vmatprep.subr.bf16.mxu0 0
        %822 = vmatpush2.bf16.xpose.msra.mxu0 0
        %823 = vmatprep.subr.bf16.mxu0 0
        %824 = vmatpush2.bf16.xpose.msra.mxu0 0
        %825 = vmatprep.subr.bf16.mxu0 0
        %826 = vmatpush2.bf16.xpose.msra.mxu0 0
        %827 = vmatprep.subr.bf16.mxu0 0
        %828 = vmatpush2.bf16.xpose.msra.mxu0 0
        %829 = vmatprep.mubr.bf16.mxu0 0
        %830 = vmatmul.mubr.bf16.gmra.mxu0 %v792
        %v831 = vpop.f32.mrf.mxu0
        %v832 = vadd.f32 0.0, %v831
        %v833 = vpop.f32.mrf.mxu0
        %v834 = vpop.f32.mrf.mxu0
        %v835 = vpop.f32.mrf.mxu0
        %836 = vdwg.mxu0
        %v837 = vsel %vm718, 16843009, 0
        %v838 = vunpack.c.0.s8 %v837
        %vm839 = vcmp.ne.s32.totalorder %v838, 0
        %v840 = vsel %vm839, %v832, -1e+09
        %vm841 = vcmask 64512
        %v842 = vsel %vm841, %v840, -inf
        %843 = vmax.xlane.f32.xlu0 %v842
        %v844 = vpop.xlane.xlu0 %843
        %v845 = vsub.f32 %v840, %v844
        %v846 = vmul.f32 %v845, 1.442695
        %v847 = vpow.pop %v846
        %v848 = vsel %vm841, %v847, 0.0
        %849 = vadd.xlane.f32.xlu0 %v848
        %v850 = vpop.xlane.xlu0 %849
        %v851 = vrcp.pop %v850
        %v852 = vmul.f32 %v847, %v851
        %v853 = vpack.c.bf16 %v852, %v852
        %v855 = vsel %vm841, %v853, 0
        %vm857 = vcmask 1043456
        %v859 = vsel %vm857, %v788, 0
        %861 = vmatprep.subr.bf16.mxu0 0
        %862 = vmatpush1.bf16.msra.mxu0 0
        %863 = vmatprep.subr.bf16.mxu0 0
        %864 = vmatpush1.bf16.msra.mxu0 0
        %865 = vmatprep.subr.bf16.mxu0 0
        %866 = vmatpush1.bf16.msra.mxu0 0
        %867 = vmatprep.subr.bf16.mxu0 0
        %868 = vmatpush1.bf16.msra.mxu0 0
        %869 = vmatprep.subr.bf16.mxu0 0
        %870 = vmatpush1.bf16.msra.mxu0 0
        %871 = vmatprep.subr.bf16.mxu0 0
        %872 = vmatpush1.bf16.msra.mxu0 0
        %873 = vmatprep.subr.bf16.mxu0 0
        %874 = vmatpush1.bf16.msra.mxu0 0
        %875 = vmatprep.subr.bf16.mxu0 0
        %876 = vmatpush1.bf16.msra.mxu0 %v859
        %877 = vmatprep.subr.bf16.mxu0 0
        %878 = vmatpush2.bf16.msra.mxu0 0
        %879 = vmatprep.subr.bf16.mxu0 0
        %880 = vmatpush2.bf16.msra.mxu0 0
        %881 = vmatprep.subr.bf16.mxu0 0
        %882 = vmatpush2.bf16.msra.mxu0 0
        %883 = vmatprep.subr.bf16.mxu0 0
        %884 = vmatpush2.bf16.msra.mxu0 0
        %885 = vmatprep.subr.bf16.mxu0 0
        %886 = vmatpush2.bf16.msra.mxu0 0
        %887 = vmatprep.subr.bf16.mxu0 0
        %888 = vmatpush2.bf16.msra.mxu0 0
        %889 = vmatprep.subr.bf16.mxu0 0
        %890 = vmatpush2.bf16.msra.mxu0 0
        %891 = vmatprep.subr.bf16.mxu0 0
        %892 = vmatpush2.bf16.msra.mxu0 0
        %893 = vmatprep.mubr.bf16.mxu0 0
        %894 = vmatmul.mubr.bf16.gmra.mxu0 %v855
        %v895 = vpop.f32.mrf.mxu0
        %v896 = vadd.f32 0.0, %v895
        %v897 = vpop.f32.mrf.mxu0
        %v898 = vpop.f32.mrf.mxu0
        %v899 = vpop.f32.mrf.mxu0
        %900 = vdwg.mxu0
        %v901 = vld [vmem:[%s10] sm:$0xf]
        %v902 = vld [vmem:[%s10 + $0x4] sm:$0xf]
        %v903 = vpack.c.bf16 %v896, %v896
        %905 = vrot.lane.b32.xlu0 %v789, 112
        %v906 = vpop.permute.xlu0 %905
        %v908 = vunpack.c.l.b16 %v787
        %v909 = vpack.c.b16 %v908, %v908
        %910 = vrot.lane.b32.xlu0 %v909, 112
        %v911 = vpop.permute.xlu0 %910
        %v913 = vsel %vm790, %v906, 0
        %v916 = vsel %vm790, %v911, 0
        %918 = vmatprep.subr.bf16.mxu0 0
        %919 = vmatpush1.bf16.xpose.msra.mxu0 0
        %920 = vmatprep.subr.bf16.mxu0 0
        %921 = vmatpush1.bf16.xpose.msra.mxu0 0
        %922 = vmatprep.subr.bf16.mxu0 0
        %923 = vmatpush1.bf16.xpose.msra.mxu0 0
        %924 = vmatprep.subr.bf16.mxu0 0
        %925 = vmatpush1.bf16.xpose.msra.mxu0 0
        %926 = vmatprep.subr.bf16.mxu0 0
        %927 = vmatpush1.bf16.xpose.msra.mxu0 0
        %928 = vmatprep.subr.bf16.mxu0 0
        %929 = vmatpush1.bf16.xpose.msra.mxu0 0
        %930 = vmatprep.subr.bf16.mxu0 0
        %931 = vmatpush1.bf16.xpose.msra.mxu0 0
        %932 = vmatprep.subr.bf16.mxu0 0
        %933 = vmatpush1.bf16.xpose.msra.mxu0 %v916
        %934 = vmatprep.subr.bf16.mxu0 0
        %935 = vmatpush2.bf16.xpose.msra.mxu0 0
        %936 = vmatprep.subr.bf16.mxu0 0
        %937 = vmatpush2.bf16.xpose.msra.mxu0 0
        %938 = vmatprep.subr.bf16.mxu0 0
        %939 = vmatpush2.bf16.xpose.msra.mxu0 0
        %940 = vmatprep.subr.bf16.mxu0 0
        %941 = vmatpush2.bf16.xpose.msra.mxu0 0
        %942 = vmatprep.subr.bf16.mxu0 0
        %943 = vmatpush2.bf16.xpose.msra.mxu0 0
        %944 = vmatprep.subr.bf16.mxu0 0
        %945 = vmatpush2.bf16.xpose.msra.mxu0 0
        %946 = vmatprep.subr.bf16.mxu0 0
        %947 = vmatpush2.bf16.xpose.msra.mxu0 0
        %948 = vmatprep.subr.bf16.mxu0 0
        %949 = vmatpush2.bf16.xpose.msra.mxu0 0
        %950 = vmatprep.mubr.bf16.mxu0 0
        %951 = vmatmul.mubr.bf16.gmra.mxu0 %v913
        %v952 = vpop.f32.mrf.mxu0
        %v953 = vadd.f32 0.0, %v952
        %v954 = vpop.f32.mrf.mxu0
        %v955 = vpop.f32.mrf.mxu0
        %v956 = vpop.f32.mrf.mxu0
        %957 = vdwg.mxu0
        %v958 = vsel %vm839, %v953, -1e+09
        %v959 = vsel %vm841, %v958, -inf
        %960 = vmax.xlane.f32.xlu0 %v959
        %v961 = vpop.xlane.xlu0 %960
        %v962 = vsub.f32 %v958, %v961
        %v963 = vmul.f32 %v962, 1.442695
        %v964 = vpow.pop %v963
        %v965 = vsel %vm841, %v964, 0.0
        %966 = vadd.xlane.f32.xlu0 %v965
        %v967 = vpop.xlane.xlu0 %966
        %v968 = vrcp.pop %v967
        %v969 = vmul.f32 %v964, %v968
        %v970 = vpack.c.bf16 %v969, %v969
        %v972 = vunpack.c.l.b16 %v788
        %v973 = vpack.c.b16 %v972, %v972
        %974 = vrot.lane.b32.xlu0 %v973, 112
        %v975 = vpop.permute.xlu0 %974
        %v977 = vsel %vm841, %v970, 0
        %v980 = vsel %vm857, %v975, 0
        %982 = vmatprep.subr.bf16.mxu0 0
        %983 = vmatpush1.bf16.msra.mxu0 0
        %984 = vmatprep.subr.bf16.mxu0 0
        %985 = vmatpush1.bf16.msra.mxu0 0
        %986 = vmatprep.subr.bf16.mxu0 0
        %987 = vmatpush1.bf16.msra.mxu0 0
        %988 = vmatprep.subr.bf16.mxu0 0
        %989 = vmatpush1.bf16.msra.mxu0 0
        %990 = vmatprep.subr.bf16.mxu0 0
        %991 = vmatpush1.bf16.msra.mxu0 0
        %992 = vmatprep.subr.bf16.mxu0 0
        %993 = vmatpush1.bf16.msra.mxu0 0
        %994 = vmatprep.subr.bf16.mxu0 0
        %995 = vmatpush1.bf16.msra.mxu0 0
        %996 = vmatprep.subr.bf16.mxu0 0
        %997 = vmatpush1.bf16.msra.mxu0 %v980
        %998 = vmatprep.subr.bf16.mxu0 0
        %999 = vmatpush2.bf16.msra.mxu0 0
        %1000 = vmatprep.subr.bf16.mxu0 0
        %1001 = vmatpush2.bf16.msra.mxu0 0
        %1002 = vmatprep.subr.bf16.mxu0 0
        %1003 = vmatpush2.bf16.msra.mxu0 0
        %1004 = vmatprep.subr.bf16.mxu0 0
        %1005 = vmatpush2.bf16.msra.mxu0 0
        %1006 = vmatprep.subr.bf16.mxu0 0
        %1007 = vmatpush2.bf16.msra.mxu0 0
        %1008 = vmatprep.subr.bf16.mxu0 0
        %1009 = vmatpush2.bf16.msra.mxu0 0
        %1010 = vmatprep.subr.bf16.mxu0 0
        %1011 = vmatpush2.bf16.msra.mxu0 0
        %1012 = vmatprep.subr.bf16.mxu0 0
        %1013 = vmatpush2.bf16.msra.mxu0 0
        %1014 = vmatprep.mubr.bf16.mxu0 0
        %1015 = vmatmul.mubr.bf16.gmra.mxu0 %v977
        %v1016 = vpop.f32.mrf.mxu0
        %v1017 = vadd.f32 0.0, %v1016
        %v1018 = vpop.f32.mrf.mxu0
        %v1019 = vpop.f32.mrf.mxu0
        %v1020 = vpop.f32.mrf.mxu0
        %1021 = vdwg.mxu0
        %v1022 = vld [vmem:[%s10 + $0x8] sm:$0xf]
        %v1023 = vld [vmem:[%s10 + $0xc] sm:$0xf]
        %v1024 = vpack.c.bf16 %v1017, %v1017
        %v1027 = vunpack.c.l.b16 %v1022
        %v1028 = vunpack.c.l.b16 %v1023
        %v1029 = vpack.c.b16 %v1028, %v1027
        %v1032 = vsel %vm790, %v1024, 0
        %1034 = vmatprep.subr.bf16.mxu0 0
        %1035 = vmatpush1.bf16.msra.mxu0 0
        %1036 = vmatprep.subr.bf16.mxu0 0
        %1037 = vmatpush1.bf16.msra.mxu0 0
        %1038 = vmatprep.subr.bf16.mxu0 0
        %1039 = vmatpush1.bf16.msra.mxu0 0
        %1040 = vmatprep.subr.bf16.mxu0 0
        %1041 = vmatpush1.bf16.msra.mxu0 0
        %1042 = vmatprep.subr.bf16.mxu0 0
        %1043 = vmatpush1.bf16.msra.mxu0 0
        %1044 = vmatprep.subr.bf16.mxu0 0
        %1045 = vmatpush1.bf16.msra.mxu0 0
        %1046 = vmatprep.subr.bf16.mxu0 0
        %1047 = vmatpush1.bf16.msra.mxu0 0
        %1048 = vmatprep.subr.bf16.mxu0 0
        %1049 = vmatpush1.bf16.msra.mxu0 %v1029
        %1050 = vmatprep.subr.bf16.mxu0 0
        %1051 = vmatpush2.bf16.msra.mxu0 0
        %1052 = vmatprep.subr.bf16.mxu0 0
        %1053 = vmatpush2.bf16.msra.mxu0 0
        %1054 = vmatprep.subr.bf16.mxu0 0
        %1055 = vmatpush2.bf16.msra.mxu0 0
        %1056 = vmatprep.subr.bf16.mxu0 0
        %1057 = vmatpush2.bf16.msra.mxu0 0
        %1058 = vmatprep.subr.bf16.mxu0 0
        %1059 = vmatpush2.bf16.msra.mxu0 0
        %1060 = vmatprep.subr.bf16.mxu0 0
        %1061 = vmatpush2.bf16.msra.mxu0 0
        %1062 = vmatprep.subr.bf16.mxu0 0
        %1063 = vmatpush2.bf16.msra.mxu0 0
        %1064 = vmatprep.subr.bf16.mxu0 0
        %1065 = vmatpush2.bf16.msra.mxu0 0
        %1066 = vmatprep.mubr.bf16.mxu0 0
        %1067 = vmatmul.mubr.bf16.gmra.mxu0 %v1032
        %v1068 = vpop.f32.mrf.mxu0
        %v1069 = vadd.f32 0.0, %v1068
        %v1070 = vpop.f32.mrf.mxu0
        %v1071 = vpop.f32.mrf.mxu0
        %v1072 = vpop.f32.mrf.mxu0
        %1073 = vdwg.mxu0
        %v1076 = vunpack.c.l.b16 %v901
        %v1077 = vunpack.c.l.b16 %v902
        %v1078 = vpack.c.b16 %v1077, %v1076
        %v1081 = vsel %vm790, %v903, 0
        %1083 = vmatprep.subr.bf16.mxu0 0
        %1084 = vmatpush1.bf16.msra.mxu0 0
        %1085 = vmatprep.subr.bf16.mxu0 0
        %1086 = vmatpush1.bf16.msra.mxu0 0
        %1087 = vmatprep.subr.bf16.mxu0 0
        %1088 = vmatpush1.bf16.msra.mxu0 0
        %1089 = vmatprep.subr.bf16.mxu0 0
        %1090 = vmatpush1.bf16.msra.mxu0 0
        %1091 = vmatprep.subr.bf16.mxu0 0
        %1092 = vmatpush1.bf16.msra.mxu0 0
        %1093 = vmatprep.subr.bf16.mxu0 0
        %1094 = vmatpush1.bf16.msra.mxu0 0
        %1095 = vmatprep.subr.bf16.mxu0 0
        %1096 = vmatpush1.bf16.msra.mxu0 0
        %1097 = vmatprep.subr.bf16.mxu0 0
        %1098 = vmatpush1.bf16.msra.mxu0 %v1078
        %1099 = vmatprep.subr.bf16.mxu0 0
        %1100 = vmatpush2.bf16.msra.mxu0 0
        %1101 = vmatprep.subr.bf16.mxu0 0
        %1102 = vmatpush2.bf16.msra.mxu0 0
        %1103 = vmatprep.subr.bf16.mxu0 0
        %1104 = vmatpush2.bf16.msra.mxu0 0
        %1105 = vmatprep.subr.bf16.mxu0 0
        %1106 = vmatpush2.bf16.msra.mxu0 0
        %1107 = vmatprep.subr.bf16.mxu0 0
        %1108 = vmatpush2.bf16.msra.mxu0 0
        %1109 = vmatprep.subr.bf16.mxu0 0
        %1110 = vmatpush2.bf16.msra.mxu0 0
        %1111 = vmatprep.subr.bf16.mxu0 0
        %1112 = vmatpush2.bf16.msra.mxu0 0
        %1113 = vmatprep.subr.bf16.mxu0 0
        %1114 = vmatpush2.bf16.msra.mxu0 0
        %1115 = vmatprep.mubr.bf16.mxu0 0
        %1116 = vmatmul.mubr.bf16.gmra.mxu0 %v1081
        %v1117 = vpop.f32.mrf.mxu0
        %v1118 = vadd.f32 %v1069, %v1117
        %v1119 = vpop.f32.mrf.mxu0
        %v1120 = vpop.f32.mrf.mxu0
        %v1121 = vpop.f32.mrf.mxu0
        %1122 = vdwg.mxu0
        %1123 = vrot.lane.b32.xlu0 %v789, 96
        %v1124 = vpop.permute.xlu0 %1123
        %1125 = vrot.lane.b32.xlu0 %v909, 96
        %v1126 = vpop.permute.xlu0 %1125
        %v1128 = vsel %vm790, %v1124, 0
        %v1131 = vsel %vm790, %v1126, 0
        %1133 = vmatprep.subr.bf16.mxu0 0
        %1134 = vmatpush1.bf16.xpose.msra.mxu0 0
        %1135 = vmatprep.subr.bf16.mxu0 0
        %1136 = vmatpush1.bf16.xpose.msra.mxu0 0
        %1137 = vmatprep.subr.bf16.mxu0 0
        %1138 = vmatpush1.bf16.xpose.msra.mxu0 0
        %1139 = vmatprep.subr.bf16.mxu0 0
        %1140 = vmatpush1.bf16.xpose.msra.mxu0 0
        %1141 = vmatprep.subr.bf16.mxu0 0
        %1142 = vmatpush1.bf16.xpose.msra.mxu0 0
        %1143 = vmatprep.subr.bf16.mxu0 0
        %1144 = vmatpush1.bf16.xpose.msra.mxu0 0
        %1145 = vmatprep.subr.bf16.mxu0 0
        %1146 = vmatpush1.bf16.xpose.msra.mxu0 0
        %1147 = vmatprep.subr.bf16.mxu0 0
        %1148 = vmatpush1.bf16.xpose.msra.mxu0 %v1131
        %1149 = vmatprep.subr.bf16.mxu0 0
        %1150 = vmatpush2.bf16.xpose.msra.mxu0 0
        %1151 = vmatprep.subr.bf16.mxu0 0
        %1152 = vmatpush2.bf16.xpose.msra.mxu0 0
        %1153 = vmatprep.subr.bf16.mxu0 0
        %1154 = vmatpush2.bf16.xpose.msra.mxu0 0
        %1155 = vmatprep.subr.bf16.mxu0 0
        %1156 = vmatpush2.bf16.xpose.msra.mxu0 0
        %1157 = vmatprep.subr.bf16.mxu0 0
        %1158 = vmatpush2.bf16.xpose.msra.mxu0 0
        %1159 = vmatprep.subr.bf16.mxu0 0
        %1160 = vmatpush2.bf16.xpose.msra.mxu0 0
        %1161 = vmatprep.subr.bf16.mxu0 0
        %1162 = vmatpush2.bf16.xpose.msra.mxu0 0
        %1163 = vmatprep.subr.bf16.mxu0 0
        %1164 = vmatpush2.bf16.xpose.msra.mxu0 0
        %1165 = vmatprep.mubr.bf16.mxu0 0
        %1166 = vmatmul.mubr.bf16.gmra.mxu0 %v1128
        %v1167 = vpop.f32.mrf.mxu0
        %v1168 = vadd.f32 0.0, %v1167
        %v1169 = vpop.f32.mrf.mxu0
        %v1170 = vpop.f32.mrf.mxu0
        %v1171 = vpop.f32.mrf.mxu0
        %1172 = vdwg.mxu0
        %v1173 = vsel %vm839, %v1168, -1e+09
        %v1174 = vsel %vm841, %v1173, -inf
        %1175 = vmax.xlane.f32.xlu0 %v1174
        %v1176 = vpop.xlane.xlu0 %1175
        %v1177 = vsub.f32 %v1173, %v1176
        %v1178 = vmul.f32 %v1177, 1.442695
        %v1179 = vpow.pop %v1178
        %v1180 = vsel %vm841, %v1179, 0.0
        %1181 = vadd.xlane.f32.xlu0 %v1180
        %v1182 = vpop.xlane.xlu0 %1181
        %v1183 = vrcp.pop %v1182
        %v1184 = vmul.f32 %v1179, %v1183
        %v1185 = vpack.c.bf16 %v1184, %v1184
        %1186 = vrot.lane.b32.xlu0 %v973, 96
        %v1187 = vpop.permute.xlu0 %1186
        %v1189 = vsel %vm841, %v1185, 0
        %v1192 = vsel %vm857, %v1187, 0
        %1194 = vmatprep.subr.bf16.mxu0 0
        %1195 = vmatpush1.bf16.msra.mxu0 0
        %1196 = vmatprep.subr.bf16.mxu0 0
        %1197 = vmatpush1.bf16.msra.mxu0 0
        %1198 = vmatprep.subr.bf16.mxu0 0
        %1199 = vmatpush1.bf16.msra.mxu0 0
        %1200 = vmatprep.subr.bf16.mxu0 0
        %1201 = vmatpush1.bf16.msra.mxu0 0
        %1202 = vmatprep.subr.bf16.mxu0 0
        %1203 = vmatpush1.bf16.msra.mxu0 0
        %1204 = vmatprep.subr.bf16.mxu0 0
        %1205 = vmatpush1.bf16.msra.mxu0 0
        %1206 = vmatprep.subr.bf16.mxu0 0
        %1207 = vmatpush1.bf16.msra.mxu0 0
        %1208 = vmatprep.subr.bf16.mxu0 0
        %1209 = vmatpush1.bf16.msra.mxu0 %v1192
        %1210 = vmatprep.subr.bf16.mxu0 0
        %1211 = vmatpush2.bf16.msra.mxu0 0
        %1212 = vmatprep.subr.bf16.mxu0 0
        %1213 = vmatpush2.bf16.msra.mxu0 0
        %1214 = vmatprep.subr.bf16.mxu0 0
        %1215 = vmatpush2.bf16.msra.mxu0 0
        %1216 = vmatprep.subr.bf16.mxu0 0
        %1217 = vmatpush2.bf16.msra.mxu0 0
        %1218 = vmatprep.subr.bf16.mxu0 0
        %1219 = vmatpush2.bf16.msra.mxu0 0
        %1220 = vmatprep.subr.bf16.mxu0 0
        %1221 = vmatpush2.bf16.msra.mxu0 0
        %1222 = vmatprep.subr.bf16.mxu0 0
        %1223 = vmatpush2.bf16.msra.mxu0 0
        %1224 = vmatprep.subr.bf16.mxu0 0
        %1225 = vmatpush2.bf16.msra.mxu0 0
        %1226 = vmatprep.mubr.bf16.mxu0 0
        %1227 = vmatmul.mubr.bf16.gmra.mxu0 %v1189
        %v1228 = vpop.f32.mrf.mxu0
        %v1229 = vadd.f32 0.0, %v1228
        %v1230 = vpop.f32.mrf.mxu0
        %v1231 = vpop.f32.mrf.mxu0
        %v1232 = vpop.f32.mrf.mxu0
        %1233 = vdwg.mxu0
        %v1234 = vld [vmem:[%s10 + $0x10] sm:$0xf]
        %v1235 = vld [vmem:[%s10 + $0x14] sm:$0xf]
        %v1236 = vpack.c.bf16 %v1229, %v1229
        %v1239 = vunpack.c.l.b16 %v1234
        %v1240 = vunpack.c.l.b16 %v1235
        %v1241 = vpack.c.b16 %v1240, %v1239
        %v1244 = vsel %vm790, %v1236, 0
        %1246 = vmatprep.subr.bf16.mxu0 0
        %1247 = vmatpush1.bf16.msra.mxu0 0
        %1248 = vmatprep.subr.bf16.mxu0 0
        %1249 = vmatpush1.bf16.msra.mxu0 0
        %1250 = vmatprep.subr.bf16.mxu0 0
        %1251 = vmatpush1.bf16.msra.mxu0 0
        %1252 = vmatprep.subr.bf16.mxu0 0
        %1253 = vmatpush1.bf16.msra.mxu0 0
        %1254 = vmatprep.subr.bf16.mxu0 0
        %1255 = vmatpush1.bf16.msra.mxu0 0
        %1256 = vmatprep.subr.bf16.mxu0 0
        %1257 = vmatpush1.bf16.msra.mxu0 0
        %1258 = vmatprep.subr.bf16.mxu0 0
        %1259 = vmatpush1.bf16.msra.mxu0 0
        %1260 = vmatprep.subr.bf16.mxu0 0
        %1261 = vmatpush1.bf16.msra.mxu0 %v1241
        %1262 = vmatprep.subr.bf16.mxu0 0
        %1263 = vmatpush2.bf16.msra.mxu0 0
        %1264 = vmatprep.subr.bf16.mxu0 0
        %1265 = vmatpush2.bf16.msra.mxu0 0
        %1266 = vmatprep.subr.bf16.mxu0 0
        %1267 = vmatpush2.bf16.msra.mxu0 0
        %1268 = vmatprep.subr.bf16.mxu0 0
        %1269 = vmatpush2.bf16.msra.mxu0 0
        %1270 = vmatprep.subr.bf16.mxu0 0
        %1271 = vmatpush2.bf16.msra.mxu0 0
        %1272 = vmatprep.subr.bf16.mxu0 0
        %1273 = vmatpush2.bf16.msra.mxu0 0
        %1274 = vmatprep.subr.bf16.mxu0 0
        %1275 = vmatpush2.bf16.msra.mxu0 0
        %1276 = vmatprep.subr.bf16.mxu0 0
        %1277 = vmatpush2.bf16.msra.mxu0 0
        %1278 = vmatprep.mubr.bf16.mxu0 0
        %1279 = vmatmul.mubr.bf16.gmra.mxu0 %v1244
        %v1280 = vpop.f32.mrf.mxu0
        %v1281 = vadd.f32 0.0, %v1280
        %v1282 = vpop.f32.mrf.mxu0
        %v1283 = vpop.f32.mrf.mxu0
        %v1284 = vpop.f32.mrf.mxu0
        %1285 = vdwg.mxu0
        %v1286 = vadd.f32 %v1118, %v1281
        %1287 = vrot.lane.b32.xlu0 %v789, 80
        %v1288 = vpop.permute.xlu0 %1287
        %1289 = vrot.lane.b32.xlu0 %v909, 80
        %v1290 = vpop.permute.xlu0 %1289
        %v1292 = vsel %vm790, %v1288, 0
        %v1295 = vsel %vm790, %v1290, 0
        %1297 = vmatprep.subr.bf16.mxu0 0
        %1298 = vmatpush1.bf16.xpose.msra.mxu0 0
        %1299 = vmatprep.subr.bf16.mxu0 0
        %1300 = vmatpush1.bf16.xpose.msra.mxu0 0
        %1301 = vmatprep.subr.bf16.mxu0 0
        %1302 = vmatpush1.bf16.xpose.msra.mxu0 0
        %1303 = vmatprep.subr.bf16.mxu0 0
        %1304 = vmatpush1.bf16.xpose.msra.mxu0 0
        %1305 = vmatprep.subr.bf16.mxu0 0
        %1306 = vmatpush1.bf16.xpose.msra.mxu0 0
        %1307 = vmatprep.subr.bf16.mxu0 0
        %1308 = vmatpush1.bf16.xpose.msra.mxu0 0
        %1309 = vmatprep.subr.bf16.mxu0 0
        %1310 = vmatpush1.bf16.xpose.msra.mxu0 0
        %1311 = vmatprep.subr.bf16.mxu0 0
        %1312 = vmatpush1.bf16.xpose.msra.mxu0 %v1295
        %1313 = vmatprep.subr.bf16.mxu0 0
        %1314 = vmatpush2.bf16.xpose.msra.mxu0 0
        %1315 = vmatprep.subr.bf16.mxu0 0
        %1316 = vmatpush2.bf16.xpose.msra.mxu0 0
        %1317 = vmatprep.subr.bf16.mxu0 0
        %1318 = vmatpush2.bf16.xpose.msra.mxu0 0
        %1319 = vmatprep.subr.bf16.mxu0 0
        %1320 = vmatpush2.bf16.xpose.msra.mxu0 0
        %1321 = vmatprep.subr.bf16.mxu0 0
        %1322 = vmatpush2.bf16.xpose.msra.mxu0 0
        %1323 = vmatprep.subr.bf16.mxu0 0
        %1324 = vmatpush2.bf16.xpose.msra.mxu0 0
        %1325 = vmatprep.subr.bf16.mxu0 0
        %1326 = vmatpush2.bf16.xpose.msra.mxu0 0
        %1327 = vmatprep.subr.bf16.mxu0 0
        %1328 = vmatpush2.bf16.xpose.msra.mxu0 0
        %1329 = vmatprep.mubr.bf16.mxu0 0
        %1330 = vmatmul.mubr.bf16.gmra.mxu0 %v1292
        %v1331 = vpop.f32.mrf.mxu0
        %v1332 = vadd.f32 0.0, %v1331
        %v1333 = vpop.f32.mrf.mxu0
        %v1334 = vpop.f32.mrf.mxu0
        %v1335 = vpop.f32.mrf.mxu0
        %1336 = vdwg.mxu0
        %v1337 = vsel %vm839, %v1332, -1e+09
        %v1338 = vsel %vm841, %v1337, -inf
        %1339 = vmax.xlane.f32.xlu0 %v1338
        %v1340 = vpop.xlane.xlu0 %1339
        %v1341 = vsub.f32 %v1337, %v1340
        %v1342 = vmul.f32 %v1341, 1.442695
        %v1343 = vpow.pop %v1342
        %v1344 = vsel %vm841, %v1343, 0.0
        %1345 = vadd.xlane.f32.xlu0 %v1344
        %v1346 = vpop.xlane.xlu0 %1345
        %v1347 = vrcp.pop %v1346
        %v1348 = vmul.f32 %v1343, %v1347
        %v1349 = vpack.c.bf16 %v1348, %v1348
        %1350 = vrot.lane.b32.xlu0 %v973, 80
        %v1351 = vpop.permute.xlu0 %1350
        %v1353 = vsel %vm841, %v1349, 0
        %v1356 = vsel %vm857, %v1351, 0
        %1358 = vmatprep.subr.bf16.mxu0 0
        %1359 = vmatpush1.bf16.msra.mxu0 0
        %1360 = vmatprep.subr.bf16.mxu0 0
        %1361 = vmatpush1.bf16.msra.mxu0 0
        %1362 = vmatprep.subr.bf16.mxu0 0
        %1363 = vmatpush1.bf16.msra.mxu0 0
        %1364 = vmatprep.subr.bf16.mxu0 0
        %1365 = vmatpush1.bf16.msra.mxu0 0
        %1366 = vmatprep.subr.bf16.mxu0 0
        %1367 = vmatpush1.bf16.msra.mxu0 0
        %1368 = vmatprep.subr.bf16.mxu0 0
        %1369 = vmatpush1.bf16.msra.mxu0 0
        %1370 = vmatprep.subr.bf16.mxu0 0
        %1371 = vmatpush1.bf16.msra.mxu0 0
        %1372 = vmatprep.subr.bf16.mxu0 0
        %1373 = vmatpush1.bf16.msra.mxu0 %v1356
        %1374 = vmatprep.subr.bf16.mxu0 0
        %1375 = vmatpush2.bf16.msra.mxu0 0
        %1376 = vmatprep.subr.bf16.mxu0 0
        %1377 = vmatpush2.bf16.msra.mxu0 0
        %1378 = vmatprep.subr.bf16.mxu0 0
        %1379 = vmatpush2.bf16.msra.mxu0 0
        %1380 = vmatprep.subr.bf16.mxu0 0
        %1381 = vmatpush2.bf16.msra.mxu0 0
        %1382 = vmatprep.subr.bf16.mxu0 0
        %1383 = vmatpush2.bf16.msra.mxu0 0
        %1384 = vmatprep.subr.bf16.mxu0 0
        %1385 = vmatpush2.bf16.msra.mxu0 0
        %1386 = vmatprep.subr.bf16.mxu0 0
        %1387 = vmatpush2.bf16.msra.mxu0 0
        %1388 = vmatprep.subr.bf16.mxu0 0
        %1389 = vmatpush2.bf16.msra.mxu0 0
        %1390 = vmatprep.mubr.bf16.mxu0 0
        %1391 = vmatmul.mubr.bf16.gmra.mxu0 %v1353
        %v1392 = vpop.f32.mrf.mxu0
        %v1393 = vadd.f32 0.0, %v1392
        %v1394 = vpop.f32.mrf.mxu0
        %v1395 = vpop.f32.mrf.mxu0
        %v1396 = vpop.f32.mrf.mxu0
        %1397 = vdwg.mxu0
        %v1398 = vld [vmem:[%s10 + $0x18] sm:$0xf]
        %v1399 = vld [vmem:[%s10 + $0x1c] sm:$0xf]
        %v1400 = vpack.c.bf16 %v1393, %v1393
        %v1403 = vunpack.c.l.b16 %v1398
        %v1404 = vunpack.c.l.b16 %v1399
        %v1405 = vpack.c.b16 %v1404, %v1403
        %v1408 = vsel %vm790, %v1400, 0
        %1410 = vmatprep.subr.bf16.mxu0 0
        %1411 = vmatpush1.bf16.msra.mxu0 0
        %1412 = vmatprep.subr.bf16.mxu0 0
        %1413 = vmatpush1.bf16.msra.mxu0 0
        %1414 = vmatprep.subr.bf16.mxu0 0
        %1415 = vmatpush1.bf16.msra.mxu0 0
        %1416 = vmatprep.subr.bf16.mxu0 0
        %1417 = vmatpush1.bf16.msra.mxu0 0
        %1418 = vmatprep.subr.bf16.mxu0 0
        %1419 = vmatpush1.bf16.msra.mxu0 0
        %1420 = vmatprep.subr.bf16.mxu0 0
        %1421 = vmatpush1.bf16.msra.mxu0 0
        %1422 = vmatprep.subr.bf16.mxu0 0
        %1423 = vmatpush1.bf16.msra.mxu0 0
        %1424 = vmatprep.subr.bf16.mxu0 0
        %1425 = vmatpush1.bf16.msra.mxu0 %v1405
        %1426 = vmatprep.subr.bf16.mxu0 0
        %1427 = vmatpush2.bf16.msra.mxu0 0
        %1428 = vmatprep.subr.bf16.mxu0 0
        %1429 = vmatpush2.bf16.msra.mxu0 0
        %1430 = vmatprep.subr.bf16.mxu0 0
        %1431 = vmatpush2.bf16.msra.mxu0 0
        %1432 = vmatprep.subr.bf16.mxu0 0
        %1433 = vmatpush2.bf16.msra.mxu0 0
        %1434 = vmatprep.subr.bf16.mxu0 0
        %1435 = vmatpush2.bf16.msra.mxu0 0
        %1436 = vmatprep.subr.bf16.mxu0 0
        %1437 = vmatpush2.bf16.msra.mxu0 0
        %1438 = vmatprep.subr.bf16.mxu0 0
        %1439 = vmatpush2.bf16.msra.mxu0 0
        %1440 = vmatprep.subr.bf16.mxu0 0
        %1441 = vmatpush2.bf16.msra.mxu0 0
        %1442 = vmatprep.mubr.bf16.mxu0 0
        %1443 = vmatmul.mubr.bf16.gmra.mxu0 %v1408
        %v1444 = vpop.f32.mrf.mxu0
        %v1445 = vadd.f32 0.0, %v1444
        %v1446 = vpop.f32.mrf.mxu0
        %v1447 = vpop.f32.mrf.mxu0
        %v1448 = vpop.f32.mrf.mxu0
        %1449 = vdwg.mxu0
        %v1450 = vadd.f32 %v1286, %v1445
        %v1451 = vld [vmem:[%s11] sm:$0x1]
        %v1453 = vlaneseq
        %v1454 = vshrl.u32 %v1453, 7
        %v1455 = vsub.s32 0, %v1454
        %v1456 = vrot.slane %v1451, %v1455
        %v1458 = vadd.f32 %v1450, %v1456
        %1459 = vst.msk [vmem:[%s568] sm:$0xff] %vm742, %v1458
        %s1460 = sand.u32 %s333, 1
        %s1461 = scalar_lea.sflag [#allocation6], %s1460
        %s1462 = sand.u32 %s333, 1
        %s1463 = smul.addr %s1462, 8
        %s1464 = scalar_lea.vmem [#allocation13], %s1463
        // Predicated region
        $region93: #{tpu_custom_call.1} parent=67 // pred_check
          %p1465 = pneg %p343
        $region94: #{tpu_custom_call.1} parent=67 // pred_check_branch
          %1467 = sbr.rel (%p1465) target = $region96
        $region95: #{tpu_custom_call.1} parent=67 // pred_region
          %s1469 = ssub.s32 128, 128
          %1470 = vsyncadd %s1461, %s1469
          %s1471 = sadd.s32 %s40, %s39
          %s1472 = smul.addr %s1471, 128
          %s1473 = scalar_lea.hbm %s12, %s1472
          %s1475 = sshll.u32 %s1464, 4
          %s1476 = int_to_ptr.vmem [resolvable:$true] %s1475
          %1478 = dma.vmem_to_hbm [thread:$0]  %s1476, 128, %s1473, %s1461
        $region96: #{tpu_custom_call.1} parent=67 // pred_fallthru
          _
      $region68: #{tpu_custom_call.1} parent=5 // pred_fallthru
        _
      %p1479 = scmp.le.s32.totalorder 2, %s30
      // Predicated region
      $region97: #{tpu_custom_call.1} parent=5 // pred_check
        %p1480 = pneg %p1479
      $region98: #{tpu_custom_call.1} parent=5 // pred_check_branch
        %1482 = sbr.rel (%p1480) target = $region100
      $region99: #{tpu_custom_call.1} parent=5 // pred_region
        %s1483 = ssub.s32 %s30, 2
        // Predicated region
        $region101: #{tpu_custom_call.1} parent=99 // pred_check
          %p1484 = pneg %p349
        $region102: #{tpu_custom_call.1} parent=99 // pred_check_branch
          %1486 = sbr.rel (%p1484) target = $region104
        $region103: #{tpu_custom_call.1} parent=99 // pred_region
          %s1487 = sand.u32 %s334, 1
          %s1488 = scalar_lea.sflag [#allocation6], %s1487
          %s1489 = sand.u32 %s334, 1
          %s1490 = smul.addr %s1489, 8
          %s1491 = scalar_lea.vmem [#allocation13], %s1490
          %1492 = dma.done %s1488, 128
        $region104: #{tpu_custom_call.1} parent=99 // pred_fallthru
          _
      $region100: #{tpu_custom_call.1} parent=5 // pred_fallthru
        _
    $region6: #{tpu_custom_call.1} parent=1 // loop_footer
      %s34 = sadd.s32 1, %s30
    $region7: #{tpu_custom_call.1} parent=1 // loop_footer_branch
      %29 = sbr.rel target = $region3
    $region8: #{tpu_custom_call.1} parent=1 // loop_exit
      _
    %1493 = vsyncpa [#allocation5], 1
    %s1494 = scalar_lea.sflag [#allocation5], 1
    %1495 = vsyncpa %s1494, 1
    %1496 = vsyncpa [#allocation8], 1
    %s1497 = scalar_lea.sflag [#allocation8], 1
    %1498 = vsyncpa %s1497, 1
    %1499 = vsyncpa [#allocation11], 1
    %s1500 = scalar_lea.sflag [#allocation11], 1
    %1501 = vsyncpa %s1500, 1
    %1502 = vsyncpa [#allocation6], 1
    %s1503 = scalar_lea.sflag [#allocation6], 1
    %1504 = vsyncpa %s1503, 1

</llo_original>
